<compile_context>
chip_gen: v5e
topology: v5e:2x2
jax: 0.10.0
libtpu: 0.0.40
codegen_flags: <defaults>
</compile_context>

<pallas_src>
import functools

import numpy as np
import jax
import jax.numpy as jnp
from jax import lax
from jax.experimental import pallas as pl
from jax.experimental.pallas import tpu as pltpu


# ---------------------------------------------------------------------------
# Host-side (trace-time) weight preprocessing.
# ---------------------------------------------------------------------------
def _make_banded_weights(wgt, w):
    """Fold the 3x3 HWIO conv weight + SAME x-padding into 3 banded matrices.

    Returns (3, w*cin, w*cout) with
        band[dy][s*cin + ci, x*cout + co] = W[dy, s-x+1, ci, co]
    for 0 <= s-x+1 <= 2 (taps falling outside [0, w) are absent == zero pad).
    The conv on a lane-dense (h, w*cin) slab is then
        out = sum_dy  x_ypadded[dy:dy+h, :] @ band[dy].
    """
    kh, kw, cin, cout = wgt.shape
    xs = np.arange(w)
    bands = []
    for dy in range(kh):
        big = jnp.zeros((w, cin, w, cout), jnp.float32)
        for dx in range(kw):
            ss = xs + dx - 1                    # source column per output col
            m = (ss >= 0) & (ss < w)
            if not np.any(m):
                continue
            big = big.at[ss[m], :, xs[m], :].set(wgt[dy, dx])
        bands.append(big.reshape(w * cin, w * cout))
    return jnp.stack(bands, axis=0)


def _make_row_select(h):
    """(2, h//2, h): [0] picks even rows, [1] picks odd rows (0/1 matmul)."""
    ho = h // 2
    i = np.arange(ho)
    even = jnp.zeros((ho, h), jnp.float32).at[i, 2 * i].set(1.0)
    odd = jnp.zeros((ho, h), jnp.float32).at[i, 2 * i + 1].set(1.0)
    return jnp.stack([even, odd], axis=0)


def _make_col_select(w, c):
    """(2, w*c, (w//2)*c): [0]/[1] pick even/odd x-blocks of c lanes."""
    wo = w // 2
    out_idx = np.arange(wo * c)
    xo, ci = out_idx // c, out_idx % c
    even = jnp.zeros((w * c, wo * c), jnp.float32).at[(2 * xo) * c + ci, out_idx].set(1.0)
    odd = jnp.zeros((w * c, wo * c), jnp.float32).at[(2 * xo + 1) * c + ci, out_idx].set(1.0)
    return jnp.stack([even, odd], axis=0)


def _const_map(ndim):
    return lambda n: (0,) * ndim


# ---------------------------------------------------------------------------
# In-kernel building blocks (one image, lane-dense slabs, all in VMEM).
# ---------------------------------------------------------------------------
def _conv3x3_relu(x2d, h, w, cin, wb_ref, b_ref, pad_ref):
    """3x3 SAME conv + bias + ReLU on a lane-dense (h, w*cin) slab.

    x2d     : (h, w*cin) value
    wb_ref  : (3, w*cin, w*cout) banded weights (x-taps + x-padding folded in)
    b_ref   : (1, w*cout) bias tiled per x-block
    pad_ref : (h+2, w*cin) VMEM scratch -- only the two halo rows are zeroed.
    returns : (h, w*cout) value
    """
    wcin = w * cin
    # y-halo only; interior is fully overwritten, so zero just the 2 border rows.
    pad_ref[0:1, :] = jnp.zeros((1, wcin), jnp.float32)
    pad_ref[h + 1:h + 2, :] = jnp.zeros((1, wcin), jnp.float32)
    pad_ref[1:h + 1, :] = x2d

    acc = jnp.dot(pad_ref[0:h, :], wb_ref[0], preferred_element_type=jnp.float32)
    acc = acc + jnp.dot(pad_ref[1:h + 1, :], wb_ref[1],
                        preferred_element_type=jnp.float32)
    acc = acc + jnp.dot(pad_ref[2:h + 2, :], wb_ref[2],
                        preferred_element_type=jnp.float32)
    return jnp.maximum(acc + b_ref[...], 0.0)


def _maxpool2x2(x2d, rsel_ref, csel_ref):
    """2x2 / stride-2 max-pool on a lane-dense (h, w*c) slab.

    Uses exact 0/1 selection matmuls (MXU has slack) + elementwise max:
      rows : max(even-row pick, odd-row pick)        -> (h/2, w*c)
      cols : max(even-block pick, odd-block pick)    -> (h/2, (w/2)*c)
    """
    r = jnp.maximum(
        jnp.dot(rsel_ref[0], x2d, preferred_element_type=jnp.float32),
        jnp.dot(rsel_ref[1], x2d, preferred_element_type=jnp.float32))
    return jnp.maximum(
        jnp.dot(r, csel_ref[0], preferred_element_type=jnp.float32),
        jnp.dot(r, csel_ref[1], preferred_element_type=jnp.float32))


def _make_fused_kernel(shapes):
    """Whole feature-extractor prefix for one image, fully in VMEM."""
    n_layers = len(shapes)
    n_pools = sum(1 for s in shapes if s[4])

    def kernel(*refs):
        i0 = 0
        x_ref = refs[i0]; i0 += 1
        wb_refs = refs[i0:i0 + n_layers]; i0 += n_layers
        b_refs = refs[i0:i0 + n_layers]; i0 += n_layers
        rsel_refs = refs[i0:i0 + n_pools]; i0 += n_pools
        csel_refs = refs[i0:i0 + n_pools]; i0 += n_pools
        o_ref = refs[i0]; i0 += 1
        pad_refs = refs[i0:i0 + n_layers]

        x = x_ref[0]                              # (H, W*Cin) lane-dense slab
        p = 0
        for i, (h, w, cin, cout, pooled) in enumerate(shapes):
            x = _conv3x3_relu(x, h, w, cin, wb_refs[i], b_refs[i], pad_refs[i])
            if pooled:
                x = _maxpool2x2(x, rsel_refs[p], csel_refs[p])
                p += 1

        # Final activation is already lane-dense (Ho, Wo*Cf) -> single store.
        o_ref[0] = x

    return kernel


# ---------------------------------------------------------------------------
# Wrapper: one fused pallas_call for the whole prefix.
# ---------------------------------------------------------------------------
def feature_extractor_forward(x_nchw, params, pool_after=(1, 3)):
    N, Cin, H, W = x_nchw.shape
    pool_after = tuple(pool_after)

    # Lane-dense input slab (N, H, W*Cin); NCHW -> NHWC is boundary glue.
    x_slab = jnp.transpose(x_nchw, (0, 2, 3, 1)).reshape(N, H, W * Cin)

    # Static per-layer shape trace: (h, w, cin, cout, pooled) -- input dims.
    shapes = []
    h, w, c = H, W, Cin
    for i, (wgt, _) in enumerate(params):
        cout = wgt.shape[-1]
        pooled = i in pool_after
        shapes.append((h, w, c, cout, pooled))
        c = cout
        if pooled:
            h //= 2
            w //= 2
    Ho, Wo, Cf = h, w, c

    # Trace-time weight preprocessing (banded matrices, lane-tiled biases,
    # pooling selection matrices).  All tiny; done once per compile.
    wbs, brows, rsels, csels = [], [], [], []
    for (hi, wi, ci, co, pooled), (wgt, b) in zip(shapes, params):
        wbs.append(_make_banded_weights(wgt, wi))              # (3, wi*ci, wi*co)
        brows.append(jnp.tile(b, (wi,)).reshape(1, wi * co))   # (1, wi*co)
        if pooled:
            rsels.append(_make_row_select(hi))                 # (2, hi//2, hi)
            csels.append(_make_col_select(wi, co))             # (2, wi*co, (wi//2)*co)

    # Only scratch: per-layer y-halo pad slabs (lane-dense, ~23 KB total).
    pads = [pltpu.VMEM((hi + 2, wi * ci), jnp.float32)
            for (hi, wi, ci, co, p) in shapes]

    operands = [x_slab, *wbs, *brows, *rsels, *csels]
    in_specs = [pl.BlockSpec((1, H, W * Cin), lambda n: (n, 0, 0))]
    for a in operands[1:]:
        in_specs.append(pl.BlockSpec(a.shape, _const_map(a.ndim)))

    kernel = _make_fused_kernel(shapes)

    out = pl.pallas_call(
        kernel,
        out_shape=jax.ShapeDtypeStruct((N, Ho, Wo * Cf), jnp.float32),
        grid=(N,),
        in_specs=in_specs,
        out_specs=pl.BlockSpec((1, Ho, Wo * Cf), lambda n: (n, 0, 0)),
        scratch_shapes=pads,
        compiler_params=pltpu.CompilerParams(
            # v7x: one image per TensorCore.  On single-TC v5e/v6e this is a
            # short serial loop (alternative: fold batch into matmul M).
            dimension_semantics=("parallel",),
        ),
    )(*operands)

    out = out.reshape(N, Ho, Wo, Cf)              # free (row-major identity)
    return jnp.transpose(out, (0, 3, 1, 2))       # NHWC -> NCHW


@functools.partial(jax.jit, static_argnums=(2,))
def _forward_jit(x_nchw, params, pool_after):
    return feature_extractor_forward(x_nchw, params, pool_after)


# ---------------------------------------------------------------------------
# FeatureExtractor = VGG19-style features[:12] prefix (feature_layer=11).
# ---------------------------------------------------------------------------
class FeatureExtractorPallas:
    def __init__(self, key, in_channels=4, widths=(8, 8, 16, 16, 32),
                 pool_after=(1, 3)):
        self.params = []
        self.pool_after = tuple(pool_after)
        cin = in_channels
        for cout in widths:
            key, kw_, kb = jax.random.split(key, 3)
            fan_in = 9 * cin
            wgt = jax.random.normal(kw_, (3, 3, cin, cout), jnp.float32) / jnp.sqrt(fan_in)
            b = 0.01 * jax.random.normal(kb, (cout,), jnp.float32)
            self.params.append((wgt, b))
            cin = cout

    def __call__(self, x_nchw):
        return _forward_jit(x_nchw, self.params, self.pool_after)


# Plain-JAX reference (for correctness check only).
def _reference(x_nchw, params, pool_after=(1, 3)):
    x = jnp.transpose(x_nchw, (0, 2, 3, 1))
    for i, (w, b) in enumerate(params):
        x = lax.conv_general_dilated(
            x, w, window_strides=(1, 1), padding="SAME",
            dimension_numbers=("NHWC", "HWIO", "NHWC"))
        x = jnp.maximum(x + b.reshape(1, 1, 1, -1), 0.0)
        if i in pool_after:
            x = lax.reduce_window(x, -jnp.inf, lax.max,
                                  (1, 2, 2, 1), (1, 2, 2, 1), "VALID")
    return jnp.transpose(x, (0, 3, 1, 2))


if __name__ == "__main__":
    key = jax.random.PRNGKey(0)
    kparams, kx = jax.random.split(key)

    model = FeatureExtractorPallas(kparams, in_channels=4)
    x = jax.random.normal(kx, (2, 4, 16, 16), jnp.float32)       # NCHW input

    out = jax.block_until_ready(model(x))
    assert out.shape == (2, 32, 4, 4), out.shape

    ref = _reference(x, model.params)
    assert jnp.allclose(out, ref, atol=1e-4, rtol=1e-4), float(jnp.abs(out - ref).max())

    print("KERNEL_OK")
</pallas_src>

<mosaic_0001>
module attributes {stable_mosaic.version = 11 : i64} {
  func.func @kernel(%arg0: i32, %arg1: memref<1x16x64xf32, #tpu.memory_space<vmem>>, %arg2: memref<3x64x128xf32, #tpu.memory_space<vmem>>, %arg3: memref<3x128x128xf32, #tpu.memory_space<vmem>>, %arg4: memref<3x64x128xf32, #tpu.memory_space<vmem>>, %arg5: memref<3x128x128xf32, #tpu.memory_space<vmem>>, %arg6: memref<3x64x128xf32, #tpu.memory_space<vmem>>, %arg7: memref<1x128xf32, #tpu.memory_space<vmem>>, %arg8: memref<1x128xf32, #tpu.memory_space<vmem>>, %arg9: memref<1x128xf32, #tpu.memory_space<vmem>>, %arg10: memref<1x128xf32, #tpu.memory_space<vmem>>, %arg11: memref<1x128xf32, #tpu.memory_space<vmem>>, %arg12: memref<2x8x16xf32, #tpu.memory_space<vmem>>, %arg13: memref<2x4x8xf32, #tpu.memory_space<vmem>>, %arg14: memref<2x128x64xf32, #tpu.memory_space<vmem>>, %arg15: memref<2x128x64xf32, #tpu.memory_space<vmem>>, %arg16: memref<1x4x128xf32, #tpu.memory_space<vmem>>, %arg17: memref<18x64xf32, #tpu.memory_space<vmem>>, %arg18: memref<18x128xf32, #tpu.memory_space<vmem>>, %arg19: memref<10x64xf32, #tpu.memory_space<vmem>>, %arg20: memref<10x128xf32, #tpu.memory_space<vmem>>, %arg21: memref<6x64xf32, #tpu.memory_space<vmem>>) attributes {dimension_semantics = [#tpu.dimension_semantics<parallel>], iteration_bounds = array<i64: 2>, scalar_prefetch = 0 : i64, scratch_operands = 5 : i64, tpu.core_type = #tpu.core_type<tc>, window_params = [{transform_indices = @transform_0, window_bounds = array<i64: 1, 16, 64>}, {pipeline_mode = #tpu.pipeline_mode<synchronous>, transform_indices = @transform_1, window_bounds = array<i64: 3, 64, 128>}, {pipeline_mode = #tpu.pipeline_mode<synchronous>, transform_indices = @transform_2, window_bounds = array<i64: 3, 128, 128>}, {pipeline_mode = #tpu.pipeline_mode<synchronous>, transform_indices = @transform_3, window_bounds = array<i64: 3, 64, 128>}, {pipeline_mode = #tpu.pipeline_mode<synchronous>, transform_indices = @transform_4, window_bounds = array<i64: 3, 128, 128>}, {pipeline_mode = #tpu.pipeline_mode<synchronous>, transform_indices = @transform_5, window_bounds = array<i64: 3, 64, 128>}, {pipeline_mode = #tpu.pipeline_mode<synchronous>, transform_indices = @transform_6, window_bounds = array<i64: 1, 128>}, {pipeline_mode = #tpu.pipeline_mode<synchronous>, transform_indices = @transform_7, window_bounds = array<i64: 1, 128>}, {pipeline_mode = #tpu.pipeline_mode<synchronous>, transform_indices = @transform_8, window_bounds = array<i64: 1, 128>}, {pipeline_mode = #tpu.pipeline_mode<synchronous>, transform_indices = @transform_9, window_bounds = array<i64: 1, 128>}, {pipeline_mode = #tpu.pipeline_mode<synchronous>, transform_indices = @transform_10, window_bounds = array<i64: 1, 128>}, {pipeline_mode = #tpu.pipeline_mode<synchronous>, transform_indices = @transform_11, window_bounds = array<i64: 2, 8, 16>}, {pipeline_mode = #tpu.pipeline_mode<synchronous>, transform_indices = @transform_12, window_bounds = array<i64: 2, 4, 8>}, {pipeline_mode = #tpu.pipeline_mode<synchronous>, transform_indices = @transform_13, window_bounds = array<i64: 2, 128, 64>}, {pipeline_mode = #tpu.pipeline_mode<synchronous>, transform_indices = @transform_14, window_bounds = array<i64: 2, 128, 64>}, {transform_indices = @transform_15, window_bounds = array<i64: 1, 4, 128>}]} {
    %c0 = arith.constant 0 : index
    %c0_0 = arith.constant 0 : index
    %c0_1 = arith.constant 0 : index
    %0 = vector.load %arg1[%c0, %c0_0, %c0_1] : memref<1x16x64xf32, #tpu.memory_space<vmem>>, vector<1x16x64xf32>
    %1 = vector.shape_cast %0 : vector<1x16x64xf32> to vector<16x64xf32>
    %cst = arith.constant 0.000000e+00 : f32
    %2 = vector.broadcast %cst : f32 to vector<1x64xf32>
    %c0_2 = arith.constant 0 : index
    %c0_3 = arith.constant 0 : index
    %3 = vector.load %arg17[%c0_2, %c0_3] : memref<18x64xf32, #tpu.memory_space<vmem>>, vector<1x64xf32>
    tpu.vector_store %arg17[%c0_2, %c0_3], %2 {strides = array<i32>} : memref<18x64xf32, #tpu.memory_space<vmem>>, vector<1x64xf32>,
    %cst_4 = arith.constant 0.000000e+00 : f32
    %4 = vector.broadcast %cst_4 : f32 to vector<1x64xf32>
    %c17 = arith.constant 17 : index
    %c0_5 = arith.constant 0 : index
    %5 = vector.load %arg17[%c17, %c0_5] : memref<18x64xf32, #tpu.memory_space<vmem>>, vector<1x64xf32>
    tpu.vector_store %arg17[%c17, %c0_5], %4 {strides = array<i32>} : memref<18x64xf32, #tpu.memory_space<vmem>>, vector<1x64xf32>,
    %c1 = arith.constant 1 : index
    %c0_6 = arith.constant 0 : index
    %6 = vector.load %arg17[%c1, %c0_6] : memref<18x64xf32, #tpu.memory_space<vmem>>, vector<16x64xf32>
    tpu.vector_store %arg17[%c1, %c0_6], %1 {strides = array<i32>} : memref<18x64xf32, #tpu.memory_space<vmem>>, vector<16x64xf32>,
    %c0_7 = arith.constant 0 : index
    %c0_8 = arith.constant 0 : index
    %7 = vector.load %arg17[%c0_7, %c0_8] : memref<18x64xf32, #tpu.memory_space<vmem>>, vector<16x64xf32>
    %c0_9 = arith.constant 0 : index
    %c0_10 = arith.constant 0 : index
    %c0_11 = arith.constant 0 : index
    %8 = vector.load %arg2[%c0_9, %c0_10, %c0_11] : memref<3x64x128xf32, #tpu.memory_space<vmem>>, vector<1x64x128xf32>
    %9 = vector.shape_cast %8 : vector<1x64x128xf32> to vector<64x128xf32>
    %cst_12 = arith.constant dense<0.000000e+00> : vector<16x128xf32>
    %10 = tpu.matmul %7, %9, %cst_12 {dimension_numbers = #tpu.dot_dimension_numbers<[1], [0], [0], [1], [0, 0, 1, 1], [], []>} : vector<16x64xf32>, vector<64x128xf32>, vector<16x128xf32> -> vector<16x128xf32>
    %c1_13 = arith.constant 1 : index
    %c0_14 = arith.constant 0 : index
    %11 = vector.load %arg17[%c1_13, %c0_14] : memref<18x64xf32, #tpu.memory_space<vmem>>, vector<16x64xf32>
    %c1_15 = arith.constant 1 : index
    %c0_16 = arith.constant 0 : index
    %c0_17 = arith.constant 0 : index
    %12 = vector.load %arg2[%c1_15, %c0_16, %c0_17] : memref<3x64x128xf32, #tpu.memory_space<vmem>>, vector<1x64x128xf32>
    %13 = vector.shape_cast %12 : vector<1x64x128xf32> to vector<64x128xf32>
    %cst_18 = arith.constant dense<0.000000e+00> : vector<16x128xf32>
    %14 = tpu.matmul %11, %13, %cst_18 {dimension_numbers = #tpu.dot_dimension_numbers<[1], [0], [0], [1], [0, 0, 1, 1], [], []>} : vector<16x64xf32>, vector<64x128xf32>, vector<16x128xf32> -> vector<16x128xf32>
    %15 = arith.addf %10, %14 : vector<16x128xf32>
    %c2 = arith.constant 2 : index
    %c0_19 = arith.constant 0 : index
    %16 = vector.load %arg17[%c2, %c0_19] : memref<18x64xf32, #tpu.memory_space<vmem>>, vector<16x64xf32>
    %c2_20 = arith.constant 2 : index
    %c0_21 = arith.constant 0 : index
    %c0_22 = arith.constant 0 : index
    %17 = vector.load %arg2[%c2_20, %c0_21, %c0_22] : memref<3x64x128xf32, #tpu.memory_space<vmem>>, vector<1x64x128xf32>
    %18 = vector.shape_cast %17 : vector<1x64x128xf32> to vector<64x128xf32>
    %cst_23 = arith.constant dense<0.000000e+00> : vector<16x128xf32>
    %19 = tpu.matmul %16, %18, %cst_23 {dimension_numbers = #tpu.dot_dimension_numbers<[1], [0], [0], [1], [0, 0, 1, 1], [], []>} : vector<16x64xf32>, vector<64x128xf32>, vector<16x128xf32> -> vector<16x128xf32>
    %20 = arith.addf %15, %19 : vector<16x128xf32>
    %c0_24 = arith.constant 0 : index
    %c0_25 = arith.constant 0 : index
    %21 = vector.load %arg7[%c0_24, %c0_25] : memref<1x128xf32, #tpu.memory_space<vmem>>, vector<1x128xf32>
    %22 = vector.broadcast %21 : vector<1x128xf32> to vector<16x128xf32>
    %23 = arith.addf %20, %22 : vector<16x128xf32>
    %cst_26 = arith.constant 0.000000e+00 : f32
    %24 = vector.broadcast %cst_26 : f32 to vector<16x128xf32>
    %25 = arith.maximumf %23, %24 : vector<16x128xf32>
    %cst_27 = arith.constant 0.000000e+00 : f32
    %26 = vector.broadcast %cst_27 : f32 to vector<1x128xf32>
    %c0_28 = arith.constant 0 : index
    %c0_29 = arith.constant 0 : index
    %27 = vector.load %arg18[%c0_28, %c0_29] : memref<18x128xf32, #tpu.memory_space<vmem>>, vector<1x128xf32>
    tpu.vector_store %arg18[%c0_28, %c0_29], %26 {strides = array<i32>} : memref<18x128xf32, #tpu.memory_space<vmem>>, vector<1x128xf32>,
    %cst_30 = arith.constant 0.000000e+00 : f32
    %28 = vector.broadcast %cst_30 : f32 to vector<1x128xf32>
    %c17_31 = arith.constant 17 : index
    %c0_32 = arith.constant 0 : index
    %29 = vector.load %arg18[%c17_31, %c0_32] : memref<18x128xf32, #tpu.memory_space<vmem>>, vector<1x128xf32>
    tpu.vector_store %arg18[%c17_31, %c0_32], %28 {strides = array<i32>} : memref<18x128xf32, #tpu.memory_space<vmem>>, vector<1x128xf32>,
    %c1_33 = arith.constant 1 : index
    %c0_34 = arith.constant 0 : index
    %30 = vector.load %arg18[%c1_33, %c0_34] : memref<18x128xf32, #tpu.memory_space<vmem>>, vector<16x128xf32>
    tpu.vector_store %arg18[%c1_33, %c0_34], %25 {strides = array<i32>} : memref<18x128xf32, #tpu.memory_space<vmem>>, vector<16x128xf32>,
    %c0_35 = arith.constant 0 : index
    %c0_36 = arith.constant 0 : index
    %31 = vector.load %arg18[%c0_35, %c0_36] : memref<18x128xf32, #tpu.memory_space<vmem>>, vector<16x128xf32>
    %c0_37 = arith.constant 0 : index
    %c0_38 = arith.constant 0 : index
    %c0_39 = arith.constant 0 : index
    %32 = vector.load %arg3[%c0_37, %c0_38, %c0_39] : memref<3x128x128xf32, #tpu.memory_space<vmem>>, vector<1x128x128xf32>
    %33 = vector.shape_cast %32 : vector<1x128x128xf32> to vector<128x128xf32>
    %cst_40 = arith.constant dense<0.000000e+00> : vector<16x128xf32>
    %34 = tpu.matmul %31, %33, %cst_40 {dimension_numbers = #tpu.dot_dimension_numbers<[1], [0], [0], [1], [0, 0, 1, 1], [], []>} : vector<16x128xf32>, vector<128x128xf32>, vector<16x128xf32> -> vector<16x128xf32>
    %c1_41 = arith.constant 1 : index
    %c0_42 = arith.constant 0 : index
    %35 = vector.load %arg18[%c1_41, %c0_42] : memref<18x128xf32, #tpu.memory_space<vmem>>, vector<16x128xf32>
    %c1_43 = arith.constant 1 : index
    %c0_44 = arith.constant 0 : index
    %c0_45 = arith.constant 0 : index
    %36 = vector.load %arg3[%c1_43, %c0_44, %c0_45] : memref<3x128x128xf32, #tpu.memory_space<vmem>>, vector<1x128x128xf32>
    %37 = vector.shape_cast %36 : vector<1x128x128xf32> to vector<128x128xf32>
    %cst_46 = arith.constant dense<0.000000e+00> : vector<16x128xf32>
    %38 = tpu.matmul %35, %37, %cst_46 {dimension_numbers = #tpu.dot_dimension_numbers<[1], [0], [0], [1], [0, 0, 1, 1], [], []>} : vector<16x128xf32>, vector<128x128xf32>, vector<16x128xf32> -> vector<16x128xf32>
    %39 = arith.addf %34, %38 : vector<16x128xf32>
    %c2_47 = arith.constant 2 : index
    %c0_48 = arith.constant 0 : index
    %40 = vector.load %arg18[%c2_47, %c0_48] : memref<18x128xf32, #tpu.memory_space<vmem>>, vector<16x128xf32>
    %c2_49 = arith.constant 2 : index
    %c0_50 = arith.constant 0 : index
    %c0_51 = arith.constant 0 : index
    %41 = vector.load %arg3[%c2_49, %c0_50, %c0_51] : memref<3x128x128xf32, #tpu.memory_space<vmem>>, vector<1x128x128xf32>
    %42 = vector.shape_cast %41 : vector<1x128x128xf32> to vector<128x128xf32>
    %cst_52 = arith.constant dense<0.000000e+00> : vector<16x128xf32>
    %43 = tpu.matmul %40, %42, %cst_52 {dimension_numbers = #tpu.dot_dimension_numbers<[1], [0], [0], [1], [0, 0, 1, 1], [], []>} : vector<16x128xf32>, vector<128x128xf32>, vector<16x128xf32> -> vector<16x128xf32>
    %44 = arith.addf %39, %43 : vector<16x128xf32>
    %c0_53 = arith.constant 0 : index
    %c0_54 = arith.constant 0 : index
    %45 = vector.load %arg8[%c0_53, %c0_54] : memref<1x128xf32, #tpu.memory_space<vmem>>, vector<1x128xf32>
    %46 = vector.broadcast %45 : vector<1x128xf32> to vector<16x128xf32>
    %47 = arith.addf %44, %46 : vector<16x128xf32>
    %cst_55 = arith.constant 0.000000e+00 : f32
    %48 = vector.broadcast %cst_55 : f32 to vector<16x128xf32>
    %49 = arith.maximumf %47, %48 : vector<16x128xf32>
    %c0_56 = arith.constant 0 : index
    %c0_57 = arith.constant 0 : index
    %c0_58 = arith.constant 0 : index
    %50 = vector.load %arg12[%c0_56, %c0_57, %c0_58] : memref<2x8x16xf32, #tpu.memory_space<vmem>>, vector<1x8x16xf32>
    %51 = vector.shape_cast %50 : vector<1x8x16xf32> to vector<8x16xf32>
    %cst_59 = arith.constant dense<0.000000e+00> : vector<8x128xf32>
    %52 = tpu.matmul %51, %49, %cst_59 {dimension_numbers = #tpu.dot_dimension_numbers<[1], [0], [0], [1], [0, 0, 1, 1], [], []>} : vector<8x16xf32>, vector<16x128xf32>, vector<8x128xf32> -> vector<8x128xf32>
    %c1_60 = arith.constant 1 : index
    %c0_61 = arith.constant 0 : index
    %c0_62 = arith.constant 0 : index
    %53 = vector.load %arg12[%c1_60, %c0_61, %c0_62] : memref<2x8x16xf32, #tpu.memory_space<vmem>>, vector<1x8x16xf32>
    %54 = vector.shape_cast %53 : vector<1x8x16xf32> to vector<8x16xf32>
    %cst_63 = arith.constant dense<0.000000e+00> : vector<8x128xf32>
    %55 = tpu.matmul %54, %49, %cst_63 {dimension_numbers = #tpu.dot_dimension_numbers<[1], [0], [0], [1], [0, 0, 1, 1], [], []>} : vector<8x16xf32>, vector<16x128xf32>, vector<8x128xf32> -> vector<8x128xf32>
    %56 = arith.maximumf %52, %55 : vector<8x128xf32>
    %c0_64 = arith.constant 0 : index
    %c0_65 = arith.constant 0 : index
    %c0_66 = arith.constant 0 : index
    %57 = vector.load %arg14[%c0_64, %c0_65, %c0_66] : memref<2x128x64xf32, #tpu.memory_space<vmem>>, vector<1x128x64xf32>
    %58 = vector.shape_cast %57 : vector<1x128x64xf32> to vector<128x64xf32>
    %cst_67 = arith.constant dense<0.000000e+00> : vector<8x64xf32>
    %59 = tpu.matmul %56, %58, %cst_67 {dimension_numbers = #tpu.dot_dimension_numbers<[1], [0], [0], [1], [0, 0, 1, 1], [], []>} : vector<8x128xf32>, vector<128x64xf32>, vector<8x64xf32> -> vector<8x64xf32>
    %c1_68 = arith.constant 1 : index
    %c0_69 = arith.constant 0 : index
    %c0_70 = arith.constant 0 : index
    %60 = vector.load %arg14[%c1_68, %c0_69, %c0_70] : memref<2x128x64xf32, #tpu.memory_space<vmem>>, vector<1x128x64xf32>
    %61 = vector.shape_cast %60 : vector<1x128x64xf32> to vector<128x64xf32>
    %cst_71 = arith.constant dense<0.000000e+00> : vector<8x64xf32>
    %62 = tpu.matmul %56, %61, %cst_71 {dimension_numbers = #tpu.dot_dimension_numbers<[1], [0], [0], [1], [0, 0, 1, 1], [], []>} : vector<8x128xf32>, vector<128x64xf32>, vector<8x64xf32> -> vector<8x64xf32>
    %63 = arith.maximumf %59, %62 : vector<8x64xf32>
    %cst_72 = arith.constant 0.000000e+00 : f32
    %64 = vector.broadcast %cst_72 : f32 to vector<1x64xf32>
    %c0_73 = arith.constant 0 : index
    %c0_74 = arith.constant 0 : index
    %65 = vector.load %arg19[%c0_73, %c0_74] : memref<10x64xf32, #tpu.memory_space<vmem>>, vector<1x64xf32>
    tpu.vector_store %arg19[%c0_73, %c0_74], %64 {strides = array<i32>} : memref<10x64xf32, #tpu.memory_space<vmem>>, vector<1x64xf32>,
    %cst_75 = arith.constant 0.000000e+00 : f32
    %66 = vector.broadcast %cst_75 : f32 to vector<1x64xf32>
    %c9 = arith.constant 9 : index
    %c0_76 = arith.constant 0 : index
    %67 = vector.load %arg19[%c9, %c0_76] : memref<10x64xf32, #tpu.memory_space<vmem>>, vector<1x64xf32>
    tpu.vector_store %arg19[%c9, %c0_76], %66 {strides = array<i32>} : memref<10x64xf32, #tpu.memory_space<vmem>>, vector<1x64xf32>,
    %c1_77 = arith.constant 1 : index
    %c0_78 = arith.constant 0 : index
    %68 = vector.load %arg19[%c1_77, %c0_78] : memref<10x64xf32, #tpu.memory_space<vmem>>, vector<8x64xf32>
    tpu.vector_store %arg19[%c1_77, %c0_78], %63 {strides = array<i32>} : memref<10x64xf32, #tpu.memory_space<vmem>>, vector<8x64xf32>,
    %c0_79 = arith.constant 0 : index
    %c0_80 = arith.constant 0 : index
    %69 = vector.load %arg19[%c0_79, %c0_80] : memref<10x64xf32, #tpu.memory_space<vmem>>, vector<8x64xf32>
    %c0_81 = arith.constant 0 : index
    %c0_82 = arith.constant 0 : index
    %c0_83 = arith.constant 0 : index
    %70 = vector.load %arg4[%c0_81, %c0_82, %c0_83] : memref<3x64x128xf32, #tpu.memory_space<vmem>>, vector<1x64x128xf32>
    %71 = vector.shape_cast %70 : vector<1x64x128xf32> to vector<64x128xf32>
    %cst_84 = arith.constant dense<0.000000e+00> : vector<8x128xf32>
    %72 = tpu.matmul %69, %71, %cst_84 {dimension_numbers = #tpu.dot_dimension_numbers<[1], [0], [0], [1], [0, 0, 1, 1], [], []>} : vector<8x64xf32>, vector<64x128xf32>, vector<8x128xf32> -> vector<8x128xf32>
    %c1_85 = arith.constant 1 : index
    %c0_86 = arith.constant 0 : index
    %73 = vector.load %arg19[%c1_85, %c0_86] : memref<10x64xf32, #tpu.memory_space<vmem>>, vector<8x64xf32>
    %c1_87 = arith.constant 1 : index
    %c0_88 = arith.constant 0 : index
    %c0_89 = arith.constant 0 : index
    %74 = vector.load %arg4[%c1_87, %c0_88, %c0_89] : memref<3x64x128xf32, #tpu.memory_space<vmem>>, vector<1x64x128xf32>
    %75 = vector.shape_cast %74 : vector<1x64x128xf32> to vector<64x128xf32>
    %cst_90 = arith.constant dense<0.000000e+00> : vector<8x128xf32>
    %76 = tpu.matmul %73, %75, %cst_90 {dimension_numbers = #tpu.dot_dimension_numbers<[1], [0], [0], [1], [0, 0, 1, 1], [], []>} : vector<8x64xf32>, vector<64x128xf32>, vector<8x128xf32> -> vector<8x128xf32>
    %77 = arith.addf %72, %76 : vector<8x128xf32>
    %c2_91 = arith.constant 2 : index
    %c0_92 = arith.constant 0 : index
    %78 = vector.load %arg19[%c2_91, %c0_92] : memref<10x64xf32, #tpu.memory_space<vmem>>, vector<8x64xf32>
    %c2_93 = arith.constant 2 : index
    %c0_94 = arith.constant 0 : index
    %c0_95 = arith.constant 0 : index
    %79 = vector.load %arg4[%c2_93, %c0_94, %c0_95] : memref<3x64x128xf32, #tpu.memory_space<vmem>>, vector<1x64x128xf32>
    %80 = vector.shape_cast %79 : vector<1x64x128xf32> to vector<64x128xf32>
    %cst_96 = arith.constant dense<0.000000e+00> : vector<8x128xf32>
    %81 = tpu.matmul %78, %80, %cst_96 {dimension_numbers = #tpu.dot_dimension_numbers<[1], [0], [0], [1], [0, 0, 1, 1], [], []>} : vector<8x64xf32>, vector<64x128xf32>, vector<8x128xf32> -> vector<8x128xf32>
    %82 = arith.addf %77, %81 : vector<8x128xf32>
    %c0_97 = arith.constant 0 : index
    %c0_98 = arith.constant 0 : index
    %83 = vector.load %arg9[%c0_97, %c0_98] : memref<1x128xf32, #tpu.memory_space<vmem>>, vector<1x128xf32>
    %84 = vector.broadcast %83 : vector<1x128xf32> to vector<8x128xf32>
    %85 = arith.addf %82, %84 : vector<8x128xf32>
    %cst_99 = arith.constant 0.000000e+00 : f32
    %86 = vector.broadcast %cst_99 : f32 to vector<8x128xf32>
    %87 = arith.maximumf %85, %86 : vector<8x128xf32>
    %cst_100 = arith.constant 0.000000e+00 : f32
    %88 = vector.broadcast %cst_100 : f32 to vector<1x128xf32>
    %c0_101 = arith.constant 0 : index
    %c0_102 = arith.constant 0 : index
    %89 = vector.load %arg20[%c0_101, %c0_102] : memref<10x128xf32, #tpu.memory_space<vmem>>, vector<1x128xf32>
    tpu.vector_store %arg20[%c0_101, %c0_102], %88 {strides = array<i32>} : memref<10x128xf32, #tpu.memory_space<vmem>>, vector<1x128xf32>,
    %cst_103 = arith.constant 0.000000e+00 : f32
    %90 = vector.broadcast %cst_103 : f32 to vector<1x128xf32>
    %c9_104 = arith.constant 9 : index
    %c0_105 = arith.constant 0 : index
    %91 = vector.load %arg20[%c9_104, %c0_105] : memref<10x128xf32, #tpu.memory_space<vmem>>, vector<1x128xf32>
    tpu.vector_store %arg20[%c9_104, %c0_105], %90 {strides = array<i32>} : memref<10x128xf32, #tpu.memory_space<vmem>>, vector<1x128xf32>,
    %c1_106 = arith.constant 1 : index
    %c0_107 = arith.constant 0 : index
    %92 = vector.load %arg20[%c1_106, %c0_107] : memref<10x128xf32, #tpu.memory_space<vmem>>, vector<8x128xf32>
    tpu.vector_store %arg20[%c1_106, %c0_107], %87 {strides = array<i32>} : memref<10x128xf32, #tpu.memory_space<vmem>>, vector<8x128xf32>,
    %c0_108 = arith.constant 0 : index
    %c0_109 = arith.constant 0 : index
    %93 = vector.load %arg20[%c0_108, %c0_109] : memref<10x128xf32, #tpu.memory_space<vmem>>, vector<8x128xf32>
    %c0_110 = arith.constant 0 : index
    %c0_111 = arith.constant 0 : index
    %c0_112 = arith.constant 0 : index
    %94 = vector.load %arg5[%c0_110, %c0_111, %c0_112] : memref<3x128x128xf32, #tpu.memory_space<vmem>>, vector<1x128x128xf32>
    %95 = vector.shape_cast %94 : vector<1x128x128xf32> to vector<128x128xf32>
    %cst_113 = arith.constant dense<0.000000e+00> : vector<8x128xf32>
    %96 = tpu.matmul %93, %95, %cst_113 {dimension_numbers = #tpu.dot_dimension_numbers<[1], [0], [0], [1], [0, 0, 1, 1], [], []>} : vector<8x128xf32>, vector<128x128xf32>, vector<8x128xf32> -> vector<8x128xf32>
    %c1_114 = arith.constant 1 : index
    %c0_115 = arith.constant 0 : index
    %97 = vector.load %arg20[%c1_114, %c0_115] : memref<10x128xf32, #tpu.memory_space<vmem>>, vector<8x128xf32>
    %c1_116 = arith.constant 1 : index
    %c0_117 = arith.constant 0 : index
    %c0_118 = arith.constant 0 : index
    %98 = vector.load %arg5[%c1_116, %c0_117, %c0_118] : memref<3x128x128xf32, #tpu.memory_space<vmem>>, vector<1x128x128xf32>
    %99 = vector.shape_cast %98 : vector<1x128x128xf32> to vector<128x128xf32>
    %cst_119 = arith.constant dense<0.000000e+00> : vector<8x128xf32>
    %100 = tpu.matmul %97, %99, %cst_119 {dimension_numbers = #tpu.dot_dimension_numbers<[1], [0], [0], [1], [0, 0, 1, 1], [], []>} : vector<8x128xf32>, vector<128x128xf32>, vector<8x128xf32> -> vector<8x128xf32>
    %101 = arith.addf %96, %100 : vector<8x128xf32>
    %c2_120 = arith.constant 2 : index
    %c0_121 = arith.constant 0 : index
    %102 = vector.load %arg20[%c2_120, %c0_121] : memref<10x128xf32, #tpu.memory_space<vmem>>, vector<8x128xf32>
    %c2_122 = arith.constant 2 : index
    %c0_123 = arith.constant 0 : index
    %c0_124 = arith.constant 0 : index
    %103 = vector.load %arg5[%c2_122, %c0_123, %c0_124] : memref<3x128x128xf32, #tpu.memory_space<vmem>>, vector<1x128x128xf32>
    %104 = vector.shape_cast %103 : vector<1x128x128xf32> to vector<128x128xf32>
    %cst_125 = arith.constant dense<0.000000e+00> : vector<8x128xf32>
    %105 = tpu.matmul %102, %104, %cst_125 {dimension_numbers = #tpu.dot_dimension_numbers<[1], [0], [0], [1], [0, 0, 1, 1], [], []>} : vector<8x128xf32>, vector<128x128xf32>, vector<8x128xf32> -> vector<8x128xf32>
    %106 = arith.addf %101, %105 : vector<8x128xf32>
    %c0_126 = arith.constant 0 : index
    %c0_127 = arith.constant 0 : index
    %107 = vector.load %arg10[%c0_126, %c0_127] : memref<1x128xf32, #tpu.memory_space<vmem>>, vector<1x128xf32>
    %108 = vector.broadcast %107 : vector<1x128xf32> to vector<8x128xf32>
    %109 = arith.addf %106, %108 : vector<8x128xf32>
    %cst_128 = arith.constant 0.000000e+00 : f32
    %110 = vector.broadcast %cst_128 : f32 to vector<8x128xf32>
    %111 = arith.maximumf %109, %110 : vector<8x128xf32>
    %c0_129 = arith.constant 0 : index
    %c0_130 = arith.constant 0 : index
    %c0_131 = arith.constant 0 : index
    %112 = vector.load %arg13[%c0_129, %c0_130, %c0_131] : memref<2x4x8xf32, #tpu.memory_space<vmem>>, vector<1x4x8xf32>
    %113 = vector.shape_cast %112 : vector<1x4x8xf32> to vector<4x8xf32>
    %cst_132 = arith.constant dense<0.000000e+00> : vector<4x128xf32>
    %114 = tpu.matmul %113, %111, %cst_132 {dimension_numbers = #tpu.dot_dimension_numbers<[1], [0], [0], [1], [0, 0, 1, 1], [], []>} : vector<4x8xf32>, vector<8x128xf32>, vector<4x128xf32> -> vector<4x128xf32>
    %c1_133 = arith.constant 1 : index
    %c0_134 = arith.constant 0 : index
    %c0_135 = arith.constant 0 : index
    %115 = vector.load %arg13[%c1_133, %c0_134, %c0_135] : memref<2x4x8xf32, #tpu.memory_space<vmem>>, vector<1x4x8xf32>
    %116 = vector.shape_cast %115 : vector<1x4x8xf32> to vector<4x8xf32>
    %cst_136 = arith.constant dense<0.000000e+00> : vector<4x128xf32>
    %117 = tpu.matmul %116, %111, %cst_136 {dimension_numbers = #tpu.dot_dimension_numbers<[1], [0], [0], [1], [0, 0, 1, 1], [], []>} : vector<4x8xf32>, vector<8x128xf32>, vector<4x128xf32> -> vector<4x128xf32>
    %118 = arith.maximumf %114, %117 : vector<4x128xf32>
    %c0_137 = arith.constant 0 : index
    %c0_138 = arith.constant 0 : index
    %c0_139 = arith.constant 0 : index
    %119 = vector.load %arg15[%c0_137, %c0_138, %c0_139] : memref<2x128x64xf32, #tpu.memory_space<vmem>>, vector<1x128x64xf32>
    %120 = vector.shape_cast %119 : vector<1x128x64xf32> to vector<128x64xf32>
    %cst_140 = arith.constant dense<0.000000e+00> : vector<4x64xf32>
    %121 = tpu.matmul %118, %120, %cst_140 {dimension_numbers = #tpu.dot_dimension_numbers<[1], [0], [0], [1], [0, 0, 1, 1], [], []>} : vector<4x128xf32>, vector<128x64xf32>, vector<4x64xf32> -> vector<4x64xf32>
    %c1_141 = arith.constant 1 : index
    %c0_142 = arith.constant 0 : index
    %c0_143 = arith.constant 0 : index
    %122 = vector.load %arg15[%c1_141, %c0_142, %c0_143] : memref<2x128x64xf32, #tpu.memory_space<vmem>>, vector<1x128x64xf32>
    %123 = vector.shape_cast %122 : vector<1x128x64xf32> to vector<128x64xf32>
    %cst_144 = arith.constant dense<0.000000e+00> : vector<4x64xf32>
    %124 = tpu.matmul %118, %123, %cst_144 {dimension_numbers = #tpu.dot_dimension_numbers<[1], [0], [0], [1], [0, 0, 1, 1], [], []>} : vector<4x128xf32>, vector<128x64xf32>, vector<4x64xf32> -> vector<4x64xf32>
    %125 = arith.maximumf %121, %124 : vector<4x64xf32>
    %cst_145 = arith.constant 0.000000e+00 : f32
    %126 = vector.broadcast %cst_145 : f32 to vector<1x64xf32>
    %c0_146 = arith.constant 0 : index
    %c0_147 = arith.constant 0 : index
    %127 = vector.load %arg21[%c0_146, %c0_147] : memref<6x64xf32, #tpu.memory_space<vmem>>, vector<1x64xf32>
    tpu.vector_store %arg21[%c0_146, %c0_147], %126 {strides = array<i32>} : memref<6x64xf32, #tpu.memory_space<vmem>>, vector<1x64xf32>,
    %cst_148 = arith.constant 0.000000e+00 : f32
    %128 = vector.broadcast %cst_148 : f32 to vector<1x64xf32>
    %c5 = arith.constant 5 : index
    %c0_149 = arith.constant 0 : index
    %129 = vector.load %arg21[%c5, %c0_149] : memref<6x64xf32, #tpu.memory_space<vmem>>, vector<1x64xf32>
    tpu.vector_store %arg21[%c5, %c0_149], %128 {strides = array<i32>} : memref<6x64xf32, #tpu.memory_space<vmem>>, vector<1x64xf32>,
    %c1_150 = arith.constant 1 : index
    %c0_151 = arith.constant 0 : index
    %130 = vector.load %arg21[%c1_150, %c0_151] : memref<6x64xf32, #tpu.memory_space<vmem>>, vector<4x64xf32>
    tpu.vector_store %arg21[%c1_150, %c0_151], %125 {strides = array<i32>} : memref<6x64xf32, #tpu.memory_space<vmem>>, vector<4x64xf32>,
    %c0_152 = arith.constant 0 : index
    %c0_153 = arith.constant 0 : index
    %131 = vector.load %arg21[%c0_152, %c0_153] : memref<6x64xf32, #tpu.memory_space<vmem>>, vector<4x64xf32>
    %c0_154 = arith.constant 0 : index
    %c0_155 = arith.constant 0 : index
    %c0_156 = arith.constant 0 : index
    %132 = vector.load %arg6[%c0_154, %c0_155, %c0_156] : memref<3x64x128xf32, #tpu.memory_space<vmem>>, vector<1x64x128xf32>
    %133 = vector.shape_cast %132 : vector<1x64x128xf32> to vector<64x128xf32>
    %cst_157 = arith.constant dense<0.000000e+00> : vector<4x128xf32>
    %134 = tpu.matmul %131, %133, %cst_157 {dimension_numbers = #tpu.dot_dimension_numbers<[1], [0], [0], [1], [0, 0, 1, 1], [], []>} : vector<4x64xf32>, vector<64x128xf32>, vector<4x128xf32> -> vector<4x128xf32>
    %c1_158 = arith.constant 1 : index
    %c0_159 = arith.constant 0 : index
    %135 = vector.load %arg21[%c1_158, %c0_159] : memref<6x64xf32, #tpu.memory_space<vmem>>, vector<4x64xf32>
    %c1_160 = arith.constant 1 : index
    %c0_161 = arith.constant 0 : index
    %c0_162 = arith.constant 0 : index
    %136 = vector.load %arg6[%c1_160, %c0_161, %c0_162] : memref<3x64x128xf32, #tpu.memory_space<vmem>>, vector<1x64x128xf32>
    %137 = vector.shape_cast %136 : vector<1x64x128xf32> to vector<64x128xf32>
    %cst_163 = arith.constant dense<0.000000e+00> : vector<4x128xf32>
    %138 = tpu.matmul %135, %137, %cst_163 {dimension_numbers = #tpu.dot_dimension_numbers<[1], [0], [0], [1], [0, 0, 1, 1], [], []>} : vector<4x64xf32>, vector<64x128xf32>, vector<4x128xf32> -> vector<4x128xf32>
    %139 = arith.addf %134, %138 : vector<4x128xf32>
    %c2_164 = arith.constant 2 : index
    %c0_165 = arith.constant 0 : index
    %140 = vector.load %arg21[%c2_164, %c0_165] : memref<6x64xf32, #tpu.memory_space<vmem>>, vector<4x64xf32>
    %c2_166 = arith.constant 2 : index
    %c0_167 = arith.constant 0 : index
    %c0_168 = arith.constant 0 : index
    %141 = vector.load %arg6[%c2_166, %c0_167, %c0_168] : memref<3x64x128xf32, #tpu.memory_space<vmem>>, vector<1x64x128xf32>
    %142 = vector.shape_cast %141 : vector<1x64x128xf32> to vector<64x128xf32>
    %cst_169 = arith.constant dense<0.000000e+00> : vector<4x128xf32>
    %143 = tpu.matmul %140, %142, %cst_169 {dimension_numbers = #tpu.dot_dimension_numbers<[1], [0], [0], [1], [0, 0, 1, 1], [], []>} : vector<4x64xf32>, vector<64x128xf32>, vector<4x128xf32> -> vector<4x128xf32>
    %144 = arith.addf %139, %143 : vector<4x128xf32>
    %c0_170 = arith.constant 0 : index
    %c0_171 = arith.constant 0 : index
    %145 = vector.load %arg11[%c0_170, %c0_171] : memref<1x128xf32, #tpu.memory_space<vmem>>, vector<1x128xf32>
    %146 = vector.broadcast %145 : vector<1x128xf32> to vector<4x128xf32>
    %147 = arith.addf %144, %146 : vector<4x128xf32>
    %cst_172 = arith.constant 0.000000e+00 : f32
    %148 = vector.broadcast %cst_172 : f32 to vector<4x128xf32>
    %149 = arith.maximumf %147, %148 : vector<4x128xf32>
    %c0_173 = arith.constant 0 : index
    %c0_174 = arith.constant 0 : index
    %c0_175 = arith.constant 0 : index
    %150 = vector.load %arg16[%c0_173, %c0_174, %c0_175] : memref<1x4x128xf32, #tpu.memory_space<vmem>>, vector<1x4x128xf32>
    %151 = vector.shape_cast %150 : vector<1x4x128xf32> to vector<4x128xf32>
    %152 = vector.shape_cast %149 : vector<4x128xf32> to vector<1x4x128xf32>
    tpu.vector_store %arg16[%c0_173, %c0_174, %c0_175], %152 {strides = array<i32>} : memref<1x4x128xf32, #tpu.memory_space<vmem>>, vector<1x4x128xf32>,
    return
  }
  func.func @transform_0(%arg0: i32) -> (i32, i32, i32) {
    %c0_i32 = arith.constant 0 : i32
    %c0_i32_0 = arith.constant 0 : i32
    %c0_i32_1 = arith.constant 0 : i32
    return %arg0, %c0_i32, %c0_i32_0 : i32, i32, i32
  }
  func.func @transform_1(%arg0: i32) -> (i32, i32, i32) {
    %c0_i32 = arith.constant 0 : i32
    %c0_i32_0 = arith.constant 0 : i32
    %c0_i32_1 = arith.constant 0 : i32
    %c0_i32_2 = arith.constant 0 : i32
    return %c0_i32, %c0_i32_0, %c0_i32_1 : i32, i32, i32
  }
  func.func @transform_2(%arg0: i32) -> (i32, i32, i32) {
    %c0_i32 = arith.constant 0 : i32
    %c0_i32_0 = arith.constant 0 : i32
    %c0_i32_1 = arith.constant 0 : i32
    %c0_i32_2 = arith.constant 0 : i32
    return %c0_i32, %c0_i32_0, %c0_i32_1 : i32, i32, i32
  }
  func.func @transform_3(%arg0: i32) -> (i32, i32, i32) {
    %c0_i32 = arith.constant 0 : i32
    %c0_i32_0 = arith.constant 0 : i32
    %c0_i32_1 = arith.constant 0 : i32
    %c0_i32_2 = arith.constant 0 : i32
    return %c0_i32, %c0_i32_0, %c0_i32_1 : i32, i32, i32
  }
  func.func @transform_4(%arg0: i32) -> (i32, i32, i32) {
    %c0_i32 = arith.constant 0 : i32
    %c0_i32_0 = arith.constant 0 : i32
    %c0_i32_1 = arith.constant 0 : i32
    %c0_i32_2 = arith.constant 0 : i32
    return %c0_i32, %c0_i32_0, %c0_i32_1 : i32, i32, i32
  }
  func.func @transform_5(%arg0: i32) -> (i32, i32, i32) {
    %c0_i32 = arith.constant 0 : i32
    %c0_i32_0 = arith.constant 0 : i32
    %c0_i32_1 = arith.constant 0 : i32
    %c0_i32_2 = arith.constant 0 : i32
    return %c0_i32, %c0_i32_0, %c0_i32_1 : i32, i32, i32
  }
  func.func @transform_6(%arg0: i32) -> (i32, i32) {
    %c0_i32 = arith.constant 0 : i32
    %c0_i32_0 = arith.constant 0 : i32
    %c0_i32_1 = arith.constant 0 : i32
    return %c0_i32, %c0_i32_0 : i32, i32
  }
  func.func @transform_7(%arg0: i32) -> (i32, i32) {
    %c0_i32 = arith.constant 0 : i32
    %c0_i32_0 = arith.constant 0 : i32
    %c0_i32_1 = arith.constant 0 : i32
    return %c0_i32, %c0_i32_0 : i32, i32
  }
  func.func @transform_8(%arg0: i32) -> (i32, i32) {
    %c0_i32 = arith.constant 0 : i32
    %c0_i32_0 = arith.constant 0 : i32
    %c0_i32_1 = arith.constant 0 : i32
    return %c0_i32, %c0_i32_0 : i32, i32
  }
  func.func @transform_9(%arg0: i32) -> (i32, i32) {
    %c0_i32 = arith.constant 0 : i32
    %c0_i32_0 = arith.constant 0 : i32
    %c0_i32_1 = arith.constant 0 : i32
    return %c0_i32, %c0_i32_0 : i32, i32
  }
  func.func @transform_10(%arg0: i32) -> (i32, i32) {
    %c0_i32 = arith.constant 0 : i32
    %c0_i32_0 = arith.constant 0 : i32
    %c0_i32_1 = arith.constant 0 : i32
    return %c0_i32, %c0_i32_0 : i32, i32
  }
  func.func @transform_11(%arg0: i32) -> (i32, i32, i32) {
    %c0_i32 = arith.constant 0 : i32
    %c0_i32_0 = arith.constant 0 : i32
    %c0_i32_1 = arith.constant 0 : i32
    %c0_i32_2 = arith.constant 0 : i32
    return %c0_i32, %c0_i32_0, %c0_i32_1 : i32, i32, i32
  }
  func.func @transform_12(%arg0: i32) -> (i32, i32, i32) {
    %c0_i32 = arith.constant 0 : i32
    %c0_i32_0 = arith.constant 0 : i32
    %c0_i32_1 = arith.constant 0 : i32
    %c0_i32_2 = arith.constant 0 : i32
    return %c0_i32, %c0_i32_0, %c0_i32_1 : i32, i32, i32
  }
  func.func @transform_13(%arg0: i32) -> (i32, i32, i32) {
    %c0_i32 = arith.constant 0 : i32
    %c0_i32_0 = arith.constant 0 : i32
    %c0_i32_1 = arith.constant 0 : i32
    %c0_i32_2 = arith.constant 0 : i32
    return %c0_i32, %c0_i32_0, %c0_i32_1 : i32, i32, i32
  }
  func.func @transform_14(%arg0: i32) -> (i32, i32, i32) {
    %c0_i32 = arith.constant 0 : i32
    %c0_i32_0 = arith.constant 0 : i32
    %c0_i32_1 = arith.constant 0 : i32
    %c0_i32_2 = arith.constant 0 : i32
    return %c0_i32, %c0_i32_0, %c0_i32_1 : i32, i32, i32
  }
  func.func @transform_15(%arg0: i32) -> (i32, i32, i32) {
    %c0_i32 = arith.constant 0 : i32
    %c0_i32_0 = arith.constant 0 : i32
    %c0_i32_1 = arith.constant 0 : i32
    return %arg0, %c0_i32, %c0_i32_0 : i32, i32, i32
  }
}

</mosaic_0001>

<llo_original>
// kernel: tile.28
$region0: #{tile.28}
  #allocation0 [shape = 's32[1]{0}', space=sflag, size = 0x4, scoped, tag = 'scoped memory for tile.28']
  %s0 = inlined_call_operand.vmem [shape: f32[8], index: 0, kind: input, shape index: {}]
  %s1 = inlined_call_operand.vmem [shape: f32[16,8], index: 1, kind: output, shape index: {}]
  // Predicated region
  $region2: #{tile.28} parent=0 // pred_check
    _
  $region3: #{tile.28} parent=0 // pred_check_branch
    %3 = sbr.rel (0) target = $region5
  $region4: #{tile.28} parent=0 // pred_region
    _
  $region5: #{tile.28} parent=0 // pred_fallthru
    _
  %v4 = vld [vmem:[%s0] ss:$0 sm:$0xff]
  %5 = vst [vmem:[%s1] sm:$0xff] %v4
  %s6 = scalar_lea.vmem %s1, 8
  %7 = vst [vmem:[%s6] sm:$0xff] %v4

// kernel: tile.29
$region0: #{tile.29}
  %s0 = inlined_call_operand.vmem [shape: f32[16,8], index: 0, kind: input, shape index: {}]
  %s1 = inlined_call_operand.vmem [shape: f32[1,128], index: 1, kind: output, shape index: {}]
  $region1: #{tile.29} parent=0
    #allocation0 [shape = 'u8[4096]{0}', space=vmem, size = 0x1000, scoped, tag = 'scoped mem for output reshape']
    %v2 = vld [vmem:[%s0] sm:$0x1]
    %vm3 = vcmask 64512
    %4 = vst.msk [vmem:[#allocation0] sm:$0x1] %vm3, %v2
    %s5 = scalar_lea.vmem %s0, 15
    %v6 = vld [vmem:[%s5] sm:$0x1]
    %7 = vrot.lane.b32.xlu0 %v6, 120
    %v8 = vpop.permute.xlu0 %7
    %vm9 = vcmask 1048512
    %10 = vst.msk [vmem:[#allocation0] sm:$0x1] %vm9, %v8
    %s11 = scalar_lea.vmem %s0, 14
    %v12 = vld [vmem:[%s11] sm:$0x1]
    %13 = vrot.lane.b32.xlu0 %v12, 112
    %v14 = vpop.permute.xlu0 %13
    %vm15 = vcmask 982912
    %16 = vst.msk [vmem:[#allocation0] sm:$0x1] %vm15, %v14
    %s17 = scalar_lea.vmem %s0, 13
    %v18 = vld [vmem:[%s17] sm:$0x1]
    %19 = vrot.lane.b32.xlu0 %v18, 104
    %v20 = vpop.permute.xlu0 %19
    %vm21 = vcmask 917312
    %22 = vst.msk [vmem:[#allocation0] sm:$0x1] %vm21, %v20
    %s23 = scalar_lea.vmem %s0, 12
    %v24 = vld [vmem:[%s23] sm:$0x1]
    %25 = vrot.lane.b32.xlu0 %v24, 96
    %v26 = vpop.permute.xlu0 %25
    %vm27 = vcmask 851712
    %28 = vst.msk [vmem:[#allocation0] sm:$0x1] %vm27, %v26
    %s29 = scalar_lea.vmem %s0, 11
    %v30 = vld [vmem:[%s29] sm:$0x1]
    %31 = vrot.lane.b32.xlu0 %v30, 88
    %v32 = vpop.permute.xlu0 %31
    %vm33 = vcmask 786112
    %34 = vst.msk [vmem:[#allocation0] sm:$0x1] %vm33, %v32
    %s35 = scalar_lea.vmem %s0, 10
    %v36 = vld [vmem:[%s35] sm:$0x1]
    %37 = vrot.lane.b32.xlu0 %v36, 80
    %v38 = vpop.permute.xlu0 %37
    %vm39 = vcmask 720512
    %40 = vst.msk [vmem:[#allocation0] sm:$0x1] %vm39, %v38
    %s41 = scalar_lea.vmem %s0, 9
    %v42 = vld [vmem:[%s41] sm:$0x1]
    %43 = vrot.lane.b32.xlu0 %v42, 72
    %v44 = vpop.permute.xlu0 %43
    %vm45 = vcmask 654912
    %46 = vst.msk [vmem:[#allocation0] sm:$0x1] %vm45, %v44
    %s47 = scalar_lea.vmem %s0, 8
    %v48 = vld [vmem:[%s47] sm:$0x1]
    %49 = vrot.lane.b32.xlu0 %v48, 64
    %v50 = vpop.permute.xlu0 %49
    %vm51 = vcmask 589312
    %52 = vst.msk [vmem:[#allocation0] sm:$0x1] %vm51, %v50
    %s53 = scalar_lea.vmem %s0, 7
    %v54 = vld [vmem:[%s53] sm:$0x1]
    %55 = vrot.lane.b32.xlu0 %v54, 56
    %v56 = vpop.permute.xlu0 %55
    %vm57 = vcmask 523712
    %58 = vst.msk [vmem:[#allocation0] sm:$0x1] %vm57, %v56
    %s59 = scalar_lea.vmem %s0, 6
    %v60 = vld [vmem:[%s59] sm:$0x1]
    %61 = vrot.lane.b32.xlu0 %v60, 48
    %v62 = vpop.permute.xlu0 %61
    %vm63 = vcmask 458112
    %64 = vst.msk [vmem:[#allocation0] sm:$0x1] %vm63, %v62
    %s65 = scalar_lea.vmem %s0, 5
    %v66 = vld [vmem:[%s65] sm:$0x1]
    %67 = vrot.lane.b32.xlu0 %v66, 40
    %v68 = vpop.permute.xlu0 %67
    %vm69 = vcmask 392512
    %70 = vst.msk [vmem:[#allocation0] sm:$0x1] %vm69, %v68
    %s71 = scalar_lea.vmem %s0, 4
    %v72 = vld [vmem:[%s71] sm:$0x1]
    %73 = vrot.lane.b32.xlu0 %v72, 32
    %v74 = vpop.permute.xlu0 %73
    %vm75 = vcmask 326912
    %76 = vst.msk [vmem:[#allocation0] sm:$0x1] %vm75, %v74
    %s77 = scalar_lea.vmem %s0, 3
    %v78 = vld [vmem:[%s77] sm:$0x1]
    %79 = vrot.lane.b32.xlu0 %v78, 24
    %v80 = vpop.permute.xlu0 %79
    %vm81 = vcmask 261312
    %82 = vst.msk [vmem:[#allocation0] sm:$0x1] %vm81, %v80
    %s83 = scalar_lea.vmem %s0, 2
    %v84 = vld [vmem:[%s83] sm:$0x1]
    %85 = vrot.lane.b32.xlu0 %v84, 16
    %v86 = vpop.permute.xlu0 %85
    %vm87 = vcmask 195712
    %88 = vst.msk [vmem:[#allocation0] sm:$0x1] %vm87, %v86
    %s89 = scalar_lea.vmem %s0, 1
    %v90 = vld [vmem:[%s89] sm:$0x1]
    %91 = vrot.lane.b32.xlu0 %v90, 8
    %v92 = vpop.permute.xlu0 %91
    %vm93 = vcmask 130112
    %94 = vst.msk [vmem:[#allocation0] sm:$0x1] %vm93, %v92
    %s96 = ssub.s32 2, 1
    %v97 = vld [vmem:[#allocation0] sm:%s96]
    %s99 = ssub.s32 2, 1
    %100 = vst [vmem:[%s1] sm:%s99] %v97

// kernel: tile.38
$region0: #{tile.38}
  #allocation0 [shape = 's32[1]{0}', space=sflag, size = 0x4, scoped, tag = 'scoped memory for tile.38']
  %s0 = inlined_call_operand.vmem [shape: f32[16], index: 0, kind: input, shape index: {}]
  %s1 = inlined_call_operand.vmem [shape: f32[8,16], index: 1, kind: output, shape index: {}]
  // Predicated region
  $region2: #{tile.38} parent=0 // pred_check
    _
  $region3: #{tile.38} parent=0 // pred_check_branch
    %3 = sbr.rel (0) target = $region5
  $region4: #{tile.38} parent=0 // pred_region
    _
  $region5: #{tile.38} parent=0 // pred_fallthru
    _
  %v4 = vld [vmem:[%s0] ss:$0 sm:$0xff]
  %5 = vst [vmem:[%s1] sm:$0xff] %v4

// kernel: tile.39
$region0: #{tile.39}
  %s0 = inlined_call_operand.vmem [shape: f32[8,16], index: 0, kind: input, shape index: {}]
  %s1 = inlined_call_operand.vmem [shape: f32[1,128], index: 1, kind: output, shape index: {}]
  $region1: #{tile.39} parent=0
    #allocation0 [shape = 'u8[4096]{0}', space=vmem, size = 0x1000, scoped, tag = 'scoped mem for output reshape']
    %v2 = vld [vmem:[%s0] sm:$0x1]
    %vm3 = vcmask 130048
    %4 = vst.msk [vmem:[#allocation0] sm:$0x1] %vm3, %v2
    %s5 = scalar_lea.vmem %s0, 7
    %v6 = vld [vmem:[%s5] sm:$0x1]
    %7 = vrot.lane.b32.xlu0 %v6, 112
    %v8 = vpop.permute.xlu0 %7
    %vm9 = vcmask 1048448
    %10 = vst.msk [vmem:[#allocation0] sm:$0x1] %vm9, %v8
    %s11 = scalar_lea.vmem %s0, 6
    %v12 = vld [vmem:[%s11] sm:$0x1]
    %13 = vrot.lane.b32.xlu0 %v12, 96
    %v14 = vpop.permute.xlu0 %13
    %vm15 = vcmask 917248
    %16 = vst.msk [vmem:[#allocation0] sm:$0x1] %vm15, %v14
    %s17 = scalar_lea.vmem %s0, 5
    %v18 = vld [vmem:[%s17] sm:$0x1]
    %19 = vrot.lane.b32.xlu0 %v18, 80
    %v20 = vpop.permute.xlu0 %19
    %vm21 = vcmask 786048
    %22 = vst.msk [vmem:[#allocation0] sm:$0x1] %vm21, %v20
    %s23 = scalar_lea.vmem %s0, 4
    %v24 = vld [vmem:[%s23] sm:$0x1]
    %25 = vrot.lane.b32.xlu0 %v24, 64
    %v26 = vpop.permute.xlu0 %25
    %vm27 = vcmask 654848
    %28 = vst.msk [vmem:[#allocation0] sm:$0x1] %vm27, %v26
    %s29 = scalar_lea.vmem %s0, 3
    %v30 = vld [vmem:[%s29] sm:$0x1]
    %31 = vrot.lane.b32.xlu0 %v30, 48
    %v32 = vpop.permute.xlu0 %31
    %vm33 = vcmask 523648
    %34 = vst.msk [vmem:[#allocation0] sm:$0x1] %vm33, %v32
    %s35 = scalar_lea.vmem %s0, 2
    %v36 = vld [vmem:[%s35] sm:$0x1]
    %37 = vrot.lane.b32.xlu0 %v36, 32
    %v38 = vpop.permute.xlu0 %37
    %vm39 = vcmask 392448
    %40 = vst.msk [vmem:[#allocation0] sm:$0x1] %vm39, %v38
    %s41 = scalar_lea.vmem %s0, 1
    %v42 = vld [vmem:[%s41] sm:$0x1]
    %43 = vrot.lane.b32.xlu0 %v42, 16
    %v44 = vpop.permute.xlu0 %43
    %vm45 = vcmask 261248
    %46 = vst.msk [vmem:[#allocation0] sm:$0x1] %vm45, %v44
    %s48 = ssub.s32 2, 1
    %v49 = vld [vmem:[#allocation0] sm:%s48]
    %s51 = ssub.s32 2, 1
    %52 = vst [vmem:[%s1] sm:%s51] %v49

// kernel: tile.48
$region0: #{tile.48}
  #allocation0 [shape = 's32[1]{0}', space=sflag, size = 0x4, scoped, tag = 'scoped memory for tile.48']
  %s0 = inlined_call_operand.vmem [shape: f32[32], index: 0, kind: input, shape index: {}]
  %s1 = inlined_call_operand.vmem [shape: f32[4,32], index: 1, kind: output, shape index: {}]
  // Predicated region
  $region2: #{tile.48} parent=0 // pred_check
    _
  $region3: #{tile.48} parent=0 // pred_check_branch
    %3 = sbr.rel (0) target = $region5
  $region4: #{tile.48} parent=0 // pred_region
    _
  $region5: #{tile.48} parent=0 // pred_fallthru
    _
  %v4 = vld [vmem:[%s0] ss:$0 sm:$0xff]
  %5 = vst [vmem:[%s1] sm:$0xf] %v4

// kernel: tile.49
$region0: #{tile.49}
  %s0 = inlined_call_operand.vmem [shape: f32[4,32], index: 0, kind: input, shape index: {}]
  %s1 = inlined_call_operand.vmem [shape: f32[1,128], index: 1, kind: output, shape index: {}]
  $region1: #{tile.49} parent=0
    #allocation0 [shape = 'u8[4096]{0}', space=vmem, size = 0x1000, scoped, tag = 'scoped mem for output reshape']
    #allocation1 [shape = 'u8[4096]{0}', space=vmem, size = 0x1000, scoped, tag = 'scoped mem for input reshape']
    %s3 = ssub.s32 16, 1
    %v4 = vld [vmem:[%s0] sm:%s3]
    %5 = vst [vmem:[#allocation1] sm:%s3] %v4
    %v6 = vld [vmem:[#allocation1] sm:$0x1]
    %vm7 = vcmask 261120
    %8 = vst.msk [vmem:[#allocation0] sm:$0x1] %vm7, %v6
    %s9 = scalar_lea.vmem [#allocation1], 3
    %v10 = vld [vmem:[%s9] sm:$0x1]
    %11 = vrot.lane.b32.xlu0 %v10, 96
    %v12 = vpop.permute.xlu0 %11
    %vm13 = vcmask 1048320
    %14 = vst.msk [vmem:[#allocation0] sm:$0x1] %vm13, %v12
    %s15 = scalar_lea.vmem [#allocation1], 2
    %v16 = vld [vmem:[%s15] sm:$0x1]
    %17 = vrot.lane.b32.xlu0 %v16, 64
    %v18 = vpop.permute.xlu0 %17
    %vm19 = vcmask 785920
    %20 = vst.msk [vmem:[#allocation0] sm:$0x1] %vm19, %v18
    %s21 = scalar_lea.vmem [#allocation1], 1
    %v22 = vld [vmem:[%s21] sm:$0x1]
    %23 = vrot.lane.b32.xlu0 %v22, 32
    %v24 = vpop.permute.xlu0 %23
    %vm25 = vcmask 523520
    %26 = vst.msk [vmem:[#allocation0] sm:$0x1] %vm25, %v24
    %s28 = ssub.s32 2, 1
    %v29 = vld [vmem:[#allocation0] sm:%s28]
    %s31 = ssub.s32 2, 1
    %32 = vst [vmem:[%s1] sm:%s31] %v29

// kernel: _forward_jit.1
$region0: #{_forward_jit.1}
  #allocation0 [shape = 'u32[]', space=smem, size = 0x4, offset = 0x4, fixed_abs, tag = 'smem constant byte address 0x4 - core index']
  #allocation1 [shape = 'u32[72,128]{1,0:T(1,128)}', space=vmem, size = 0x9000, scoped, tag = 'internal scratch']
  #allocation2 [shape = 'f32[18,64]{1,0:T(8,128)}', space=vmem, size = 0x3000, scoped, tag = 'scratch operand']
  #allocation3 [shape = 'f32[18,128]{1,0:T(8,128)}', space=vmem, size = 0x3000, scoped, tag = 'scratch operand']
  #allocation4 [shape = 'f32[10,64]{1,0:T(8,128)}', space=vmem, size = 0x2000, scoped, tag = 'scratch operand']
  #allocation5 [shape = 'f32[10,128]{1,0:T(8,128)}', space=vmem, size = 0x2000, scoped, tag = 'scratch operand']
  #allocation6 [shape = 'f32[6,64]{1,0:T(8,128)}', space=vmem, size = 0x1000, scoped, tag = 'scratch operand']
  %s0 = inlined_call_operand.vmem [shape: f32[2,16,64], index: 0, kind: input, shape index: {}]
  %s1 = inlined_call_operand.vmem [shape: f32[3,64,128], index: 1, kind: input, shape index: {}]
  %s2 = inlined_call_operand.vmem [shape: f32[3,128,128], index: 2, kind: input, shape index: {}]
  %s3 = inlined_call_operand.vmem [shape: f32[3,64,128], index: 3, kind: input, shape index: {}]
  %s4 = inlined_call_operand.vmem [shape: f32[3,128,128], index: 4, kind: input, shape index: {}]
  %s5 = inlined_call_operand.vmem [shape: f32[3,64,128], index: 5, kind: input, shape index: {}]
  %s6 = inlined_call_operand.vmem [shape: f32[1,128], index: 6, kind: input, shape index: {}]
  %s7 = inlined_call_operand.vmem [shape: f32[1,128], index: 7, kind: input, shape index: {}]
  %s8 = inlined_call_operand.vmem [shape: f32[1,128], index: 8, kind: input, shape index: {}]
  %s9 = inlined_call_operand.vmem [shape: f32[1,128], index: 9, kind: input, shape index: {}]
  %s10 = inlined_call_operand.vmem [shape: f32[1,128], index: 10, kind: input, shape index: {}]
  %s11 = inlined_call_operand.vmem [shape: f32[2,8,16], index: 11, kind: input, shape index: {}]
  %s12 = inlined_call_operand.vmem [shape: f32[2,4,8], index: 12, kind: input, shape index: {}]
  %s13 = inlined_call_operand.vmem [shape: f32[2,128,64], index: 13, kind: input, shape index: {}]
  %s14 = inlined_call_operand.vmem [shape: f32[2,128,64], index: 14, kind: input, shape index: {}]
  %s15 = inlined_call_operand.vmem [shape: f32[2,4,128], index: 15, kind: output, shape index: {}]
  %s16 = sld [smem:[#allocation0]]
  $region93: #{_forward_jit.1} parent=0
    _
  %s18 = ssub.s32 1, %s16
  %s19 = scalar_select 0, %s18, %s16
  loop: start=0, step=1, limit=4
  $region2: #{_forward_jit.1} parent=0 // loop_pre_header
    _
  $region3: #{_forward_jit.1} parent=0 // loop_header
    %s21 = sphi 0, %s25
    %p22 = scmp.ge.s32.totalorder %s21, 4
    %s31 = sphi 0, %s33
    %s34 = sphi 0, %s31
    %s35 = sphi 0, %s34
    %s51 = sphi 0, %s35
    %s55 = sphi 0, %s55
    %s57 = sphi 0, %s55
    %s58 = sphi 0, %s57
    %s72 = sphi 0, %s58
    %s76 = sphi 0, %s76
    %s78 = sphi 0, %s76
    %s79 = sphi 0, %s78
    %s93 = sphi 0, %s79
    %s97 = sphi 0, %s97
    %s99 = sphi 0, %s97
    %s100 = sphi 0, %s99
    %s114 = sphi 0, %s100
    %s118 = sphi 0, %s118
    %s120 = sphi 0, %s118
    %s121 = sphi 0, %s120
    %s135 = sphi 0, %s121
    %s139 = sphi 0, %s139
    %s141 = sphi 0, %s139
    %s142 = sphi 0, %s141
    %s156 = sphi 0, %s142
    %s160 = sphi 0, %s160
    %s162 = sphi 0, %s160
    %s163 = sphi 0, %s162
    %s177 = sphi 0, %s163
    %s181 = sphi 0, %s181
    %s183 = sphi 0, %s181
    %s184 = sphi 0, %s183
    %s198 = sphi 0, %s184
    %s202 = sphi 0, %s202
    %s204 = sphi 0, %s202
    %s205 = sphi 0, %s204
    %s219 = sphi 0, %s205
    %s223 = sphi 0, %s223
    %s225 = sphi 0, %s223
    %s226 = sphi 0, %s225
    %s240 = sphi 0, %s226
    %s244 = sphi 0, %s244
    %s246 = sphi 0, %s244
    %s247 = sphi 0, %s246
    %s261 = sphi 0, %s247
    %s265 = sphi 0, %s265
    %s267 = sphi 0, %s265
    %s268 = sphi 0, %s267
    %s282 = sphi 0, %s268
    %s286 = sphi 0, %s286
    %s288 = sphi 0, %s286
    %s289 = sphi 0, %s288
    %s303 = sphi 0, %s289
    %s307 = sphi 0, %s307
    %s309 = sphi 0, %s307
    %s310 = sphi 0, %s309
    %s324 = sphi 0, %s310
    %s328 = sphi 0, %s328
    %s330 = sphi 0, %s328
    %s331 = sphi 0, %s330
    %s345 = sphi 0, %s331
    %s351 = sphi 0, %s353
    %s354 = sphi 0, %s351
    %s355 = sphi 0, %s354
    %s371 = sphi 0, %s355
  $region4: #{_forward_jit.1} parent=0 // loop_header_branch
    %24 = sbr.rel (%p22) target = $region8
  $region5: #{_forward_jit.1} parent=0 // loop_body
    %s26 = ssub.s32 %s21, 1
    %s27 = ssub.s32 %s21, 2
    %s28 = sadd.s32 %s21, 1
    %s29 = ssub.s32 %s21, %s28
    %p30 = scmp.eq.s32.totalorder %s29, 0
    %s32 = sadd.s32 %s31, 1
    %s33 = scalar_select %p30, %s31, %s32
    %p36 = pneg %p30
    %p37 = scmp.eq.s32.totalorder %s21, 1
    %p38 = por %p36, %p37
    %p39 = scmp.ne.s32.totalorder %s31, %s34
    %p40 = scmp.eq.s32.totalorder %s21, 0
    %p41 = por %p39, %p40
    %p42 = scmp.ne.s32.totalorder %s31, %s34
    %p43 = scmp.eq.s32.totalorder %s26, 1
    %p44 = por %p42, %p43
    %p45 = scmp.ne.s32.totalorder %s34, %s35
    %p46 = scmp.eq.s32.totalorder %s26, 0
    %p47 = por %p45, %p46
    %p48 = scmp.ne.s32.totalorder %s34, %s35
    %p49 = scmp.eq.s32.totalorder %s27, 1
    %p50 = por %p48, %p49
    %p52 = scmp.ne.s32.totalorder %s35, %s51
    %p53 = scmp.eq.s32.totalorder %s27, 0
    %p54 = por %p52, %p53
    %s56 = sadd.s32 %s55, 1
    %p59 = scmp.eq.s32.totalorder %s21, 1
    %p60 = scmp.ne.s32.totalorder %s55, %s57
    %p61 = scmp.eq.s32.totalorder %s21, 0
    %p62 = por %p60, %p61
    %p63 = scmp.ne.s32.totalorder %s55, %s57
    %p64 = scmp.eq.s32.totalorder %s26, 1
    %p65 = por %p63, %p64
    %p66 = scmp.ne.s32.totalorder %s57, %s58
    %p67 = scmp.eq.s32.totalorder %s26, 0
    %p68 = por %p66, %p67
    %p69 = scmp.ne.s32.totalorder %s57, %s58
    %p70 = scmp.eq.s32.totalorder %s27, 1
    %p71 = por %p69, %p70
    %p73 = scmp.ne.s32.totalorder %s58, %s72
    %p74 = scmp.eq.s32.totalorder %s27, 0
    %p75 = por %p73, %p74
    %s77 = sadd.s32 %s76, 1
    %p80 = scmp.eq.s32.totalorder %s21, 1
    %p81 = scmp.ne.s32.totalorder %s76, %s78
    %p82 = scmp.eq.s32.totalorder %s21, 0
    %p83 = por %p81, %p82
    %p84 = scmp.ne.s32.totalorder %s76, %s78
    %p85 = scmp.eq.s32.totalorder %s26, 1
    %p86 = por %p84, %p85
    %p87 = scmp.ne.s32.totalorder %s78, %s79
    %p88 = scmp.eq.s32.totalorder %s26, 0
    %p89 = por %p87, %p88
    %p90 = scmp.ne.s32.totalorder %s78, %s79
    %p91 = scmp.eq.s32.totalorder %s27, 1
    %p92 = por %p90, %p91
    %p94 = scmp.ne.s32.totalorder %s79, %s93
    %p95 = scmp.eq.s32.totalorder %s27, 0
    %p96 = por %p94, %p95
    %s98 = sadd.s32 %s97, 1
    %p101 = scmp.eq.s32.totalorder %s21, 1
    %p102 = scmp.ne.s32.totalorder %s97, %s99
    %p103 = scmp.eq.s32.totalorder %s21, 0
    %p104 = por %p102, %p103
    %p105 = scmp.ne.s32.totalorder %s97, %s99
    %p106 = scmp.eq.s32.totalorder %s26, 1
    %p107 = por %p105, %p106
    %p108 = scmp.ne.s32.totalorder %s99, %s100
    %p109 = scmp.eq.s32.totalorder %s26, 0
    %p110 = por %p108, %p109
    %p111 = scmp.ne.s32.totalorder %s99, %s100
    %p112 = scmp.eq.s32.totalorder %s27, 1
    %p113 = por %p111, %p112
    %p115 = scmp.ne.s32.totalorder %s100, %s114
    %p116 = scmp.eq.s32.totalorder %s27, 0
    %p117 = por %p115, %p116
    %s119 = sadd.s32 %s118, 1
    %p122 = scmp.eq.s32.totalorder %s21, 1
    %p123 = scmp.ne.s32.totalorder %s118, %s120
    %p124 = scmp.eq.s32.totalorder %s21, 0
    %p125 = por %p123, %p124
    %p126 = scmp.ne.s32.totalorder %s118, %s120
    %p127 = scmp.eq.s32.totalorder %s26, 1
    %p128 = por %p126, %p127
    %p129 = scmp.ne.s32.totalorder %s120, %s121
    %p130 = scmp.eq.s32.totalorder %s26, 0
    %p131 = por %p129, %p130
    %p132 = scmp.ne.s32.totalorder %s120, %s121
    %p133 = scmp.eq.s32.totalorder %s27, 1
    %p134 = por %p132, %p133
    %p136 = scmp.ne.s32.totalorder %s121, %s135
    %p137 = scmp.eq.s32.totalorder %s27, 0
    %p138 = por %p136, %p137
    %s140 = sadd.s32 %s139, 1
    %p143 = scmp.eq.s32.totalorder %s21, 1
    %p144 = scmp.ne.s32.totalorder %s139, %s141
    %p145 = scmp.eq.s32.totalorder %s21, 0
    %p146 = por %p144, %p145
    %p147 = scmp.ne.s32.totalorder %s139, %s141
    %p148 = scmp.eq.s32.totalorder %s26, 1
    %p149 = por %p147, %p148
    %p150 = scmp.ne.s32.totalorder %s141, %s142
    %p151 = scmp.eq.s32.totalorder %s26, 0
    %p152 = por %p150, %p151
    %p153 = scmp.ne.s32.totalorder %s141, %s142
    %p154 = scmp.eq.s32.totalorder %s27, 1
    %p155 = por %p153, %p154
    %p157 = scmp.ne.s32.totalorder %s142, %s156
    %p158 = scmp.eq.s32.totalorder %s27, 0
    %p159 = por %p157, %p158
    %s161 = sadd.s32 %s160, 1
    %p164 = scmp.eq.s32.totalorder %s21, 1
    %p165 = scmp.ne.s32.totalorder %s160, %s162
    %p166 = scmp.eq.s32.totalorder %s21, 0
    %p167 = por %p165, %p166
    %p168 = scmp.ne.s32.totalorder %s160, %s162
    %p169 = scmp.eq.s32.totalorder %s26, 1
    %p170 = por %p168, %p169
    %p171 = scmp.ne.s32.totalorder %s162, %s163
    %p172 = scmp.eq.s32.totalorder %s26, 0
    %p173 = por %p171, %p172
    %p174 = scmp.ne.s32.totalorder %s162, %s163
    %p175 = scmp.eq.s32.totalorder %s27, 1
    %p176 = por %p174, %p175
    %p178 = scmp.ne.s32.totalorder %s163, %s177
    %p179 = scmp.eq.s32.totalorder %s27, 0
    %p180 = por %p178, %p179
    %s182 = sadd.s32 %s181, 1
    %p185 = scmp.eq.s32.totalorder %s21, 1
    %p186 = scmp.ne.s32.totalorder %s181, %s183
    %p187 = scmp.eq.s32.totalorder %s21, 0
    %p188 = por %p186, %p187
    %p189 = scmp.ne.s32.totalorder %s181, %s183
    %p190 = scmp.eq.s32.totalorder %s26, 1
    %p191 = por %p189, %p190
    %p192 = scmp.ne.s32.totalorder %s183, %s184
    %p193 = scmp.eq.s32.totalorder %s26, 0
    %p194 = por %p192, %p193
    %p195 = scmp.ne.s32.totalorder %s183, %s184
    %p196 = scmp.eq.s32.totalorder %s27, 1
    %p197 = por %p195, %p196
    %p199 = scmp.ne.s32.totalorder %s184, %s198
    %p200 = scmp.eq.s32.totalorder %s27, 0
    %p201 = por %p199, %p200
    %s203 = sadd.s32 %s202, 1
    %p206 = scmp.eq.s32.totalorder %s21, 1
    %p207 = scmp.ne.s32.totalorder %s202, %s204
    %p208 = scmp.eq.s32.totalorder %s21, 0
    %p209 = por %p207, %p208
    %p210 = scmp.ne.s32.totalorder %s202, %s204
    %p211 = scmp.eq.s32.totalorder %s26, 1
    %p212 = por %p210, %p211
    %p213 = scmp.ne.s32.totalorder %s204, %s205
    %p214 = scmp.eq.s32.totalorder %s26, 0
    %p215 = por %p213, %p214
    %p216 = scmp.ne.s32.totalorder %s204, %s205
    %p217 = scmp.eq.s32.totalorder %s27, 1
    %p218 = por %p216, %p217
    %p220 = scmp.ne.s32.totalorder %s205, %s219
    %p221 = scmp.eq.s32.totalorder %s27, 0
    %p222 = por %p220, %p221
    %s224 = sadd.s32 %s223, 1
    %p227 = scmp.eq.s32.totalorder %s21, 1
    %p228 = scmp.ne.s32.totalorder %s223, %s225
    %p229 = scmp.eq.s32.totalorder %s21, 0
    %p230 = por %p228, %p229
    %p231 = scmp.ne.s32.totalorder %s223, %s225
    %p232 = scmp.eq.s32.totalorder %s26, 1
    %p233 = por %p231, %p232
    %p234 = scmp.ne.s32.totalorder %s225, %s226
    %p235 = scmp.eq.s32.totalorder %s26, 0
    %p236 = por %p234, %p235
    %p237 = scmp.ne.s32.totalorder %s225, %s226
    %p238 = scmp.eq.s32.totalorder %s27, 1
    %p239 = por %p237, %p238
    %p241 = scmp.ne.s32.totalorder %s226, %s240
    %p242 = scmp.eq.s32.totalorder %s27, 0
    %p243 = por %p241, %p242
    %s245 = sadd.s32 %s244, 1
    %p248 = scmp.eq.s32.totalorder %s21, 1
    %p249 = scmp.ne.s32.totalorder %s244, %s246
    %p250 = scmp.eq.s32.totalorder %s21, 0
    %p251 = por %p249, %p250
    %p252 = scmp.ne.s32.totalorder %s244, %s246
    %p253 = scmp.eq.s32.totalorder %s26, 1
    %p254 = por %p252, %p253
    %p255 = scmp.ne.s32.totalorder %s246, %s247
    %p256 = scmp.eq.s32.totalorder %s26, 0
    %p257 = por %p255, %p256
    %p258 = scmp.ne.s32.totalorder %s246, %s247
    %p259 = scmp.eq.s32.totalorder %s27, 1
    %p260 = por %p258, %p259
    %p262 = scmp.ne.s32.totalorder %s247, %s261
    %p263 = scmp.eq.s32.totalorder %s27, 0
    %p264 = por %p262, %p263
    %s266 = sadd.s32 %s265, 1
    %p269 = scmp.eq.s32.totalorder %s21, 1
    %p270 = scmp.ne.s32.totalorder %s265, %s267
    %p271 = scmp.eq.s32.totalorder %s21, 0
    %p272 = por %p270, %p271
    %p273 = scmp.ne.s32.totalorder %s265, %s267
    %p274 = scmp.eq.s32.totalorder %s26, 1
    %p275 = por %p273, %p274
    %p276 = scmp.ne.s32.totalorder %s267, %s268
    %p277 = scmp.eq.s32.totalorder %s26, 0
    %p278 = por %p276, %p277
    %p279 = scmp.ne.s32.totalorder %s267, %s268
    %p280 = scmp.eq.s32.totalorder %s27, 1
    %p281 = por %p279, %p280
    %p283 = scmp.ne.s32.totalorder %s268, %s282
    %p284 = scmp.eq.s32.totalorder %s27, 0
    %p285 = por %p283, %p284
    %s287 = sadd.s32 %s286, 1
    %p290 = scmp.eq.s32.totalorder %s21, 1
    %p291 = scmp.ne.s32.totalorder %s286, %s288
    %p292 = scmp.eq.s32.totalorder %s21, 0
    %p293 = por %p291, %p292
    %p294 = scmp.ne.s32.totalorder %s286, %s288
    %p295 = scmp.eq.s32.totalorder %s26, 1
    %p296 = por %p294, %p295
    %p297 = scmp.ne.s32.totalorder %s288, %s289
    %p298 = scmp.eq.s32.totalorder %s26, 0
    %p299 = por %p297, %p298
    %p300 = scmp.ne.s32.totalorder %s288, %s289
    %p301 = scmp.eq.s32.totalorder %s27, 1
    %p302 = por %p300, %p301
    %p304 = scmp.ne.s32.totalorder %s289, %s303
    %p305 = scmp.eq.s32.totalorder %s27, 0
    %p306 = por %p304, %p305
    %s308 = sadd.s32 %s307, 1
    %p311 = scmp.eq.s32.totalorder %s21, 1
    %p312 = scmp.ne.s32.totalorder %s307, %s309
    %p313 = scmp.eq.s32.totalorder %s21, 0
    %p314 = por %p312, %p313
    %p315 = scmp.ne.s32.totalorder %s307, %s309
    %p316 = scmp.eq.s32.totalorder %s26, 1
    %p317 = por %p315, %p316
    %p318 = scmp.ne.s32.totalorder %s309, %s310
    %p319 = scmp.eq.s32.totalorder %s26, 0
    %p320 = por %p318, %p319
    %p321 = scmp.ne.s32.totalorder %s309, %s310
    %p322 = scmp.eq.s32.totalorder %s27, 1
    %p323 = por %p321, %p322
    %p325 = scmp.ne.s32.totalorder %s310, %s324
    %p326 = scmp.eq.s32.totalorder %s27, 0
    %p327 = por %p325, %p326
    %s329 = sadd.s32 %s328, 1
    %p332 = scmp.eq.s32.totalorder %s21, 1
    %p333 = scmp.ne.s32.totalorder %s328, %s330
    %p334 = scmp.eq.s32.totalorder %s21, 0
    %p335 = por %p333, %p334
    %p336 = scmp.ne.s32.totalorder %s328, %s330
    %p337 = scmp.eq.s32.totalorder %s26, 1
    %p338 = por %p336, %p337
    %p339 = scmp.ne.s32.totalorder %s330, %s331
    %p340 = scmp.eq.s32.totalorder %s26, 0
    %p341 = por %p339, %p340
    %p342 = scmp.ne.s32.totalorder %s330, %s331
    %p343 = scmp.eq.s32.totalorder %s27, 1
    %p344 = por %p342, %p343
    %p346 = scmp.ne.s32.totalorder %s331, %s345
    %p347 = scmp.eq.s32.totalorder %s27, 0
    %p348 = por %p346, %p347
    %s349 = ssub.s32 %s21, %s28
    %p350 = scmp.eq.s32.totalorder %s349, 0
    %s352 = sadd.s32 %s351, 1
    %s353 = scalar_select %p350, %s351, %s352
    %p356 = pneg %p350
    %p357 = scmp.eq.s32.totalorder %s21, 1
    %p358 = por %p356, %p357
    %p359 = scmp.ne.s32.totalorder %s351, %s354
    %p360 = scmp.eq.s32.totalorder %s21, 0
    %p361 = por %p359, %p360
    %p362 = scmp.ne.s32.totalorder %s351, %s354
    %p363 = scmp.eq.s32.totalorder %s26, 1
    %p364 = por %p362, %p363
    %p365 = scmp.ne.s32.totalorder %s354, %s355
    %p366 = scmp.eq.s32.totalorder %s26, 0
    %p367 = por %p365, %p366
    %p368 = scmp.ne.s32.totalorder %s354, %s355
    %p369 = scmp.eq.s32.totalorder %s27, 1
    %p370 = por %p368, %p369
    %p372 = scmp.ne.s32.totalorder %s355, %s371
    %p373 = scmp.eq.s32.totalorder %s27, 0
    %p374 = por %p372, %p373
    %p375 = scmp.le.s32.totalorder 1, %s21
    %p376 = scmp.lt.s32.totalorder %s21, 3
    %p377 = pnand %p375, %p376
    %p378 = pneg %p377
    // Predicated region
    $region9: #{_forward_jit.1} parent=5 // pred_check
      _
    $region10: #{_forward_jit.1} parent=5 // pred_check_branch
      %380 = sbr.rel (%p377) target = $region12
    $region11: #{_forward_jit.1} parent=5 // pred_region
      %s381 = ssub.s32 %s21, 1
      // Predicated region
      $region13: #{_forward_jit.1} parent=11 // pred_check
        %p382 = pneg %p68
      $region14: #{_forward_jit.1} parent=11 // pred_check_branch
        %384 = sbr.rel (%p382) target = $region16
      $region15: #{_forward_jit.1} parent=11 // pred_region
        _
      $region16: #{_forward_jit.1} parent=11 // pred_fallthru
        _
      // Predicated region
      $region17: #{_forward_jit.1} parent=11 // pred_check
        %p385 = pneg %p89
      $region18: #{_forward_jit.1} parent=11 // pred_check_branch
        %387 = sbr.rel (%p385) target = $region20
      $region19: #{_forward_jit.1} parent=11 // pred_region
        _
      $region20: #{_forward_jit.1} parent=11 // pred_fallthru
        _
      // Predicated region
      $region21: #{_forward_jit.1} parent=11 // pred_check
        %p388 = pneg %p110
      $region22: #{_forward_jit.1} parent=11 // pred_check_branch
        %390 = sbr.rel (%p388) target = $region24
      $region23: #{_forward_jit.1} parent=11 // pred_region
        _
      $region24: #{_forward_jit.1} parent=11 // pred_fallthru
        _
      // Predicated region
      $region25: #{_forward_jit.1} parent=11 // pred_check
        %p391 = pneg %p131
      $region26: #{_forward_jit.1} parent=11 // pred_check_branch
        %393 = sbr.rel (%p391) target = $region28
      $region27: #{_forward_jit.1} parent=11 // pred_region
        _
      $region28: #{_forward_jit.1} parent=11 // pred_fallthru
        _
      // Predicated region
      $region29: #{_forward_jit.1} parent=11 // pred_check
        %p394 = pneg %p152
      $region30: #{_forward_jit.1} parent=11 // pred_check_branch
        %396 = sbr.rel (%p394) target = $region32
      $region31: #{_forward_jit.1} parent=11 // pred_region
        _
      $region32: #{_forward_jit.1} parent=11 // pred_fallthru
        _
      // Predicated region
      $region33: #{_forward_jit.1} parent=11 // pred_check
        %p397 = pneg %p173
      $region34: #{_forward_jit.1} parent=11 // pred_check_branch
        %399 = sbr.rel (%p397) target = $region36
      $region35: #{_forward_jit.1} parent=11 // pred_region
        _
      $region36: #{_forward_jit.1} parent=11 // pred_fallthru
        _
      // Predicated region
      $region37: #{_forward_jit.1} parent=11 // pred_check
        %p400 = pneg %p194
      $region38: #{_forward_jit.1} parent=11 // pred_check_branch
        %402 = sbr.rel (%p400) target = $region40
      $region39: #{_forward_jit.1} parent=11 // pred_region
        _
      $region40: #{_forward_jit.1} parent=11 // pred_fallthru
        _
      // Predicated region
      $region41: #{_forward_jit.1} parent=11 // pred_check
        %p403 = pneg %p215
      $region42: #{_forward_jit.1} parent=11 // pred_check_branch
        %405 = sbr.rel (%p403) target = $region44
      $region43: #{_forward_jit.1} parent=11 // pred_region
        _
      $region44: #{_forward_jit.1} parent=11 // pred_fallthru
        _
      // Predicated region
      $region45: #{_forward_jit.1} parent=11 // pred_check
        %p406 = pneg %p236
      $region46: #{_forward_jit.1} parent=11 // pred_check_branch
        %408 = sbr.rel (%p406) target = $region48
      $region47: #{_forward_jit.1} parent=11 // pred_region
        _
      $region48: #{_forward_jit.1} parent=11 // pred_fallthru
        _
      // Predicated region
      $region49: #{_forward_jit.1} parent=11 // pred_check
        %p409 = pneg %p257
      $region50: #{_forward_jit.1} parent=11 // pred_check_branch
        %411 = sbr.rel (%p409) target = $region52
      $region51: #{_forward_jit.1} parent=11 // pred_region
        _
      $region52: #{_forward_jit.1} parent=11 // pred_fallthru
        _
      // Predicated region
      $region53: #{_forward_jit.1} parent=11 // pred_check
        %p412 = pneg %p278
      $region54: #{_forward_jit.1} parent=11 // pred_check_branch
        %414 = sbr.rel (%p412) target = $region56
      $region55: #{_forward_jit.1} parent=11 // pred_region
        _
      $region56: #{_forward_jit.1} parent=11 // pred_fallthru
        _
      // Predicated region
      $region57: #{_forward_jit.1} parent=11 // pred_check
        %p415 = pneg %p299
      $region58: #{_forward_jit.1} parent=11 // pred_check_branch
        %417 = sbr.rel (%p415) target = $region60
      $region59: #{_forward_jit.1} parent=11 // pred_region
        _
      $region60: #{_forward_jit.1} parent=11 // pred_fallthru
        _
      // Predicated region
      $region61: #{_forward_jit.1} parent=11 // pred_check
        %p418 = pneg %p320
      $region62: #{_forward_jit.1} parent=11 // pred_check_branch
        %420 = sbr.rel (%p418) target = $region64
      $region63: #{_forward_jit.1} parent=11 // pred_region
        _
      $region64: #{_forward_jit.1} parent=11 // pred_fallthru
        _
      // Predicated region
      $region65: #{_forward_jit.1} parent=11 // pred_check
        %p421 = pneg %p341
      $region66: #{_forward_jit.1} parent=11 // pred_check_branch
        %423 = sbr.rel (%p421) target = $region68
      $region67: #{_forward_jit.1} parent=11 // pred_region
        _
      $region68: #{_forward_jit.1} parent=11 // pred_fallthru
        _
    $region12: #{_forward_jit.1} parent=5 // pred_fallthru
      _
    %p424 = scmp.lt.s32.totalorder %s21, 2
    // Predicated region
    $region69: #{_forward_jit.1} parent=5 // pred_check
      %p425 = pneg %p424
    $region70: #{_forward_jit.1} parent=5 // pred_check_branch
      %427 = sbr.rel (%p425) target = $region72
    $region71: #{_forward_jit.1} parent=5 // pred_region
      // Predicated region
      $region73: #{_forward_jit.1} parent=71 // pred_check
        %p428 = pneg %p41
      $region74: #{_forward_jit.1} parent=71 // pred_check_branch
        %430 = sbr.rel (%p428) target = $region76
      $region75: #{_forward_jit.1} parent=71 // pred_region
        %p431 = scmp.lt.s32.totalorder %s21, 1
        %s432 = scalar_select %p431, %s21, 1
        %s433 = smul.addr %s432, 2
        %s434 = smul.addr %s433, 8
        %s435 = scalar_lea.vmem %s0, %s434
      $region76: #{_forward_jit.1} parent=71 // pred_fallthru
        _
    $region72: #{_forward_jit.1} parent=5 // pred_fallthru
      _
    %p436 = scmp.le.s32.totalorder 1, %s21
    %p437 = scmp.lt.s32.totalorder %s21, 3
    %p438 = pnand %p436, %p437
    %p439 = pneg %p438
    // Predicated region
    $region77: #{_forward_jit.1} parent=5 // pred_check
      _
    $region78: #{_forward_jit.1} parent=5 // pred_check_branch
      %441 = sbr.rel (%p438) target = $region80
    $region79: #{_forward_jit.1} parent=5 // pred_region
      %s442 = ssub.s32 %s21, 1
      %p443 = scmp.lt.s32.totalorder %s26, 1
      %s444 = scalar_select %p443, %s26, 1
      %s445 = smul.addr %s444, 2
      %s446 = smul.addr %s445, 8
      %s447 = scalar_lea.vmem %s0, %s446
      %p448 = pneg %p47
      %p449 = pneg %p44
      %p450 = pneg %p68
      %p451 = pneg %p65
      %p452 = pneg %p89
      %p453 = pneg %p86
      %p454 = pneg %p110
      %p455 = pneg %p107
      %p456 = pneg %p131
      %p457 = pneg %p128
      %p458 = pneg %p152
      %p459 = pneg %p149
      %p460 = pneg %p173
      %p461 = pneg %p170
      %p462 = pneg %p194
      %p463 = pneg %p191
      %p464 = pneg %p215
      %p465 = pneg %p212
      %p466 = pneg %p236
      %p467 = pneg %p233
      %p468 = pneg %p257
      %p469 = pneg %p254
      %p470 = pneg %p278
      %p471 = pneg %p275
      %p472 = pneg %p299
      %p473 = pneg %p296
      %p474 = pneg %p320
      %p475 = pneg %p317
      %p476 = pneg %p341
      %p477 = pneg %p338
      %p478 = pneg %p367
      %p479 = pneg %p364
      %p480 = scmp.lt.s32.totalorder %s26, 1
      %s481 = scalar_select %p480, %s26, 1
      %s482 = smul.addr %s481, 4
      %s483 = scalar_lea.vmem %s15, %s482
      %p484 = scmp.lt.s32.totalorder %s26, 1
      %s485 = scalar_select %p484, %s26, 1
      %s486 = smul.addr %s485, 2
      %s487 = smul.addr %s486, 8
      %s488 = scalar_lea.vmem %s0, %s487
      %p489 = scmp.lt.s32.totalorder %s26, 1
      %s490 = scalar_select %p489, %s26, 1
      %s491 = smul.addr %s490, 4
      %s492 = scalar_lea.vmem %s15, %s491
      %v493 = vld [vmem:[%s488] sm:$0xff]
      %v494 = vld [vmem:[%s488 + $0x8] sm:$0xff]
      %vm495 = vcmask 516096
      %496 = vst.msk [vmem:[#allocation2] sm:$0x1] %vm495, 0.0
      %497 = vst.msk [vmem:[#allocation2 + $0x11] sm:$0x1] %vm495, 0.0
      %vm498 = vcmask 523264
      %499 = vst.msk [vmem:[#allocation2 + $0x1] sm:$0xff] %vm498, %v493
      %500 = vst.msk [vmem:[#allocation2 + $0x9] sm:$0xff] %vm498, %v494
      %v501 = vld [vmem:[#allocation2] sm:$0xff]
      %v502 = vld [vmem:[#allocation2 + $0x8] sm:$0xff]
      %v503 = vld [vmem:[%s1] sm:$0xff]
      %v504 = vld [vmem:[%s1 + $0x8] sm:$0xff]
      %v505 = vld [vmem:[%s1 + $0x10] sm:$0xff]
      %v506 = vld [vmem:[%s1 + $0x18] sm:$0xff]
      %v507 = vld [vmem:[%s1 + $0x20] sm:$0xff]
      %v508 = vld [vmem:[%s1 + $0x28] sm:$0xff]
      %v509 = vld [vmem:[%s1 + $0x30] sm:$0xff]
      %v510 = vld [vmem:[%s1 + $0x38] sm:$0xff]
      %v511 = vld [vmem:[#allocation2 + $0x1] sm:$0xff]
      %v512 = vld [vmem:[#allocation2 + $0x9] sm:$0xff]
      %s513 = scalar_lea.vmem %s1, 64
      %v514 = vld [vmem:[%s513] sm:$0xff]
      %v515 = vld [vmem:[%s513 + $0x8] sm:$0xff]
      %v516 = vld [vmem:[%s513 + $0x10] sm:$0xff]
      %v517 = vld [vmem:[%s513 + $0x18] sm:$0xff]
      %v518 = vld [vmem:[%s513 + $0x20] sm:$0xff]
      %v519 = vld [vmem:[%s513 + $0x28] sm:$0xff]
      %v520 = vld [vmem:[%s513 + $0x30] sm:$0xff]
      %v521 = vld [vmem:[%s513 + $0x38] sm:$0xff]
      %v523 = vsel %vm498, %v511, 0
      %v526 = vsel %vm498, %v512, 0
      %528 = vmatpush.msra.mxu0 0.0
      %529 = vmatpush.msra.mxu0 0.0
      %530 = vmatpush.msra.mxu0 0.0
      %531 = vmatpush.msra.mxu0 0.0
      %532 = vmatpush.msra.mxu0 0.0
      %533 = vmatpush.msra.mxu0 0.0
      %534 = vmatpush.msra.mxu0 0.0
      %535 = vmatpush.msra.mxu0 0.0
      %536 = vmatpush.msra.mxu0 %v521
      %537 = vmatpush.msra.mxu0 %v520
      %538 = vmatpush.msra.mxu0 %v519
      %539 = vmatpush.msra.mxu0 %v518
      %540 = vmatpush.msra.mxu0 %v517
      %541 = vmatpush.msra.mxu0 %v516
      %542 = vmatpush.msra.mxu0 %v515
      %543 = vmatpush.msra.mxu0 %v514
      %544 = vmatmul.f32.gmra.mxu0 %v523
      %v545 = vpop.f32.mrf.mxu0
      %v546 = vadd.f32 0.0, %v545
      %547 = vmatmul.f32.gmra.mxu0 %v526
      %v548 = vpop.f32.mrf.mxu0
      %v549 = vadd.f32 0.0, %v548
      %550 = vdwg.mxu0
      %v552 = vsel %vm498, %v501, 0
      %v555 = vsel %vm498, %v502, 0
      %557 = vmatpush.msra.mxu0 0.0
      %558 = vmatpush.msra.mxu0 0.0
      %559 = vmatpush.msra.mxu0 0.0
      %560 = vmatpush.msra.mxu0 0.0
      %561 = vmatpush.msra.mxu0 0.0
      %562 = vmatpush.msra.mxu0 0.0
      %563 = vmatpush.msra.mxu0 0.0
      %564 = vmatpush.msra.mxu0 0.0
      %565 = vmatpush.msra.mxu0 %v510
      %566 = vmatpush.msra.mxu0 %v509
      %567 = vmatpush.msra.mxu0 %v508
      %568 = vmatpush.msra.mxu0 %v507
      %569 = vmatpush.msra.mxu0 %v506
      %570 = vmatpush.msra.mxu0 %v505
      %571 = vmatpush.msra.mxu0 %v504
      %572 = vmatpush.msra.mxu0 %v503
      %573 = vmatmul.f32.gmra.mxu0 %v552
      %v574 = vpop.f32.mrf.mxu0
      %v575 = vadd.f32 %v546, %v574
      %576 = vmatmul.f32.gmra.mxu0 %v555
      %v577 = vpop.f32.mrf.mxu0
      %v578 = vadd.f32 %v549, %v577
      %579 = vdwg.mxu0
      %v580 = vld [vmem:[#allocation2 + $0x2] sm:$0xff]
      %v581 = vld [vmem:[#allocation2 + $0xa] sm:$0xff]
      %s582 = scalar_lea.vmem %s1, 128
      %v583 = vld [vmem:[%s582] sm:$0xff]
      %v584 = vld [vmem:[%s582 + $0x8] sm:$0xff]
      %v585 = vld [vmem:[%s582 + $0x10] sm:$0xff]
      %v586 = vld [vmem:[%s582 + $0x18] sm:$0xff]
      %v587 = vld [vmem:[%s582 + $0x20] sm:$0xff]
      %v588 = vld [vmem:[%s582 + $0x28] sm:$0xff]
      %v589 = vld [vmem:[%s582 + $0x30] sm:$0xff]
      %v590 = vld [vmem:[%s582 + $0x38] sm:$0xff]
      %v592 = vsel %vm498, %v580, 0
      %v595 = vsel %vm498, %v581, 0
      %597 = vmatpush.msra.mxu0 0.0
      %598 = vmatpush.msra.mxu0 0.0
      %599 = vmatpush.msra.mxu0 0.0
      %600 = vmatpush.msra.mxu0 0.0
      %601 = vmatpush.msra.mxu0 0.0
      %602 = vmatpush.msra.mxu0 0.0
      %603 = vmatpush.msra.mxu0 0.0
      %604 = vmatpush.msra.mxu0 0.0
      %605 = vmatpush.msra.mxu0 %v590
      %606 = vmatpush.msra.mxu0 %v589
      %607 = vmatpush.msra.mxu0 %v588
      %608 = vmatpush.msra.mxu0 %v587
      %609 = vmatpush.msra.mxu0 %v586
      %610 = vmatpush.msra.mxu0 %v585
      %611 = vmatpush.msra.mxu0 %v584
      %612 = vmatpush.msra.mxu0 %v583
      %613 = vmatmul.f32.gmra.mxu0 %v592
      %v614 = vpop.f32.mrf.mxu0
      %v615 = vadd.f32 0.0, %v614
      %616 = vmatmul.f32.gmra.mxu0 %v595
      %v617 = vpop.f32.mrf.mxu0
      %v618 = vadd.f32 0.0, %v617
      %619 = vdwg.mxu0
      %v620 = vadd.f32 %v575, %v615
      %v621 = vadd.f32 %v578, %v618
      %v622 = vld [vmem:[%s6] sm:$0x1]
      %v624 = vperm.slane %v622, 0
      %v626 = vadd.f32 %v620, %v624
      %v627 = vadd.f32 %v621, %v624
      %v628 = vmax.f32 %v626, 0.0
      %v629 = vmax.f32 %v627, 0.0
      %630 = vst [vmem:[#allocation3] sm:$0x1] 0.0
      %631 = vst [vmem:[#allocation3 + $0x11] sm:$0x1] 0.0
      %632 = vst [vmem:[#allocation3 + $0x1] sm:$0xff] %v628
      %633 = vst [vmem:[#allocation3 + $0x9] sm:$0xff] %v629
      %v634 = vld [vmem:[#allocation3] sm:$0xff]
      %v635 = vld [vmem:[#allocation3 + $0x8] sm:$0xff]
      %v636 = vld [vmem:[%s2] sm:$0xff]
      %v637 = vld [vmem:[%s2 + $0x8] sm:$0xff]
      %v638 = vld [vmem:[%s2 + $0x10] sm:$0xff]
      %v639 = vld [vmem:[%s2 + $0x18] sm:$0xff]
      %v640 = vld [vmem:[%s2 + $0x20] sm:$0xff]
      %v641 = vld [vmem:[%s2 + $0x28] sm:$0xff]
      %v642 = vld [vmem:[%s2 + $0x30] sm:$0xff]
      %v643 = vld [vmem:[%s2 + $0x38] sm:$0xff]
      %v644 = vld [vmem:[%s2 + $0x40] sm:$0xff]
      %v645 = vld [vmem:[%s2 + $0x48] sm:$0xff]
      %v646 = vld [vmem:[%s2 + $0x50] sm:$0xff]
      %v647 = vld [vmem:[%s2 + $0x58] sm:$0xff]
      %v648 = vld [vmem:[%s2 + $0x60] sm:$0xff]
      %v649 = vld [vmem:[%s2 + $0x68] sm:$0xff]
      %v650 = vld [vmem:[%s2 + $0x70] sm:$0xff]
      %v651 = vld [vmem:[%s2 + $0x78] sm:$0xff]
      %v652 = vld [vmem:[#allocation3 + $0x1] sm:$0xff]
      %v653 = vld [vmem:[#allocation3 + $0x9] sm:$0xff]
      %s654 = scalar_lea.vmem %s2, 128
      %v655 = vld [vmem:[%s654] sm:$0xff]
      %v656 = vld [vmem:[%s654 + $0x8] sm:$0xff]
      %v657 = vld [vmem:[%s654 + $0x10] sm:$0xff]
      %v658 = vld [vmem:[%s654 + $0x18] sm:$0xff]
      %v659 = vld [vmem:[%s654 + $0x20] sm:$0xff]
      %v660 = vld [vmem:[%s654 + $0x28] sm:$0xff]
      %v661 = vld [vmem:[%s654 + $0x30] sm:$0xff]
      %v662 = vld [vmem:[%s654 + $0x38] sm:$0xff]
      %v663 = vld [vmem:[%s654 + $0x40] sm:$0xff]
      %v664 = vld [vmem:[%s654 + $0x48] sm:$0xff]
      %v665 = vld [vmem:[%s654 + $0x50] sm:$0xff]
      %v666 = vld [vmem:[%s654 + $0x58] sm:$0xff]
      %v667 = vld [vmem:[%s654 + $0x60] sm:$0xff]
      %v668 = vld [vmem:[%s654 + $0x68] sm:$0xff]
      %v669 = vld [vmem:[%s654 + $0x70] sm:$0xff]
      %v670 = vld [vmem:[%s654 + $0x78] sm:$0xff]
      %671 = vmatpush.msra.mxu0 %v670
      %672 = vmatpush.msra.mxu0 %v669
      %673 = vmatpush.msra.mxu0 %v668
      %674 = vmatpush.msra.mxu0 %v667
      %675 = vmatpush.msra.mxu0 %v666
      %676 = vmatpush.msra.mxu0 %v665
      %677 = vmatpush.msra.mxu0 %v664
      %678 = vmatpush.msra.mxu0 %v663
      %679 = vmatpush.msra.mxu0 %v662
      %680 = vmatpush.msra.mxu0 %v661
      %681 = vmatpush.msra.mxu0 %v660
      %682 = vmatpush.msra.mxu0 %v659
      %683 = vmatpush.msra.mxu0 %v658
      %684 = vmatpush.msra.mxu0 %v657
      %685 = vmatpush.msra.mxu0 %v656
      %686 = vmatpush.msra.mxu0 %v655
      %687 = vmatmul.f32.gmra.mxu0 %v652
      %v688 = vpop.f32.mrf.mxu0
      %v689 = vadd.f32 0.0, %v688
      %690 = vmatmul.f32.gmra.mxu0 %v653
      %v691 = vpop.f32.mrf.mxu0
      %v692 = vadd.f32 0.0, %v691
      %693 = vdwg.mxu0
      %694 = vmatpush.msra.mxu0 %v651
      %695 = vmatpush.msra.mxu0 %v650
      %696 = vmatpush.msra.mxu0 %v649
      %697 = vmatpush.msra.mxu0 %v648
      %698 = vmatpush.msra.mxu0 %v647
      %699 = vmatpush.msra.mxu0 %v646
      %700 = vmatpush.msra.mxu0 %v645
      %701 = vmatpush.msra.mxu0 %v644
      %702 = vmatpush.msra.mxu0 %v643
      %703 = vmatpush.msra.mxu0 %v642
      %704 = vmatpush.msra.mxu0 %v641
      %705 = vmatpush.msra.mxu0 %v640
      %706 = vmatpush.msra.mxu0 %v639
      %707 = vmatpush.msra.mxu0 %v638
      %708 = vmatpush.msra.mxu0 %v637
      %709 = vmatpush.msra.mxu0 %v636
      %710 = vmatmul.f32.gmra.mxu0 %v634
      %v711 = vpop.f32.mrf.mxu0
      %v712 = vadd.f32 %v689, %v711
      %713 = vmatmul.f32.gmra.mxu0 %v635
      %v714 = vpop.f32.mrf.mxu0
      %v715 = vadd.f32 %v692, %v714
      %716 = vdwg.mxu0
      %v717 = vld [vmem:[#allocation3 + $0x2] sm:$0xff]
      %v718 = vld [vmem:[#allocation3 + $0xa] sm:$0xff]
      %s719 = scalar_lea.vmem %s2, 256
      %v720 = vld [vmem:[%s719] sm:$0xff]
      %v721 = vld [vmem:[%s719 + $0x8] sm:$0xff]
      %v722 = vld [vmem:[%s719 + $0x10] sm:$0xff]
      %v723 = vld [vmem:[%s719 + $0x18] sm:$0xff]
      %v724 = vld [vmem:[%s719 + $0x20] sm:$0xff]
      %v725 = vld [vmem:[%s719 + $0x28] sm:$0xff]
      %v726 = vld [vmem:[%s719 + $0x30] sm:$0xff]
      %v727 = vld [vmem:[%s719 + $0x38] sm:$0xff]
      %v728 = vld [vmem:[%s719 + $0x40] sm:$0xff]
      %v729 = vld [vmem:[%s719 + $0x48] sm:$0xff]
      %v730 = vld [vmem:[%s719 + $0x50] sm:$0xff]
      %v731 = vld [vmem:[%s719 + $0x58] sm:$0xff]
      %v732 = vld [vmem:[%s719 + $0x60] sm:$0xff]
      %v733 = vld [vmem:[%s719 + $0x68] sm:$0xff]
      %v734 = vld [vmem:[%s719 + $0x70] sm:$0xff]
      %v735 = vld [vmem:[%s719 + $0x78] sm:$0xff]
      %736 = vmatpush.msra.mxu0 %v735
      %737 = vmatpush.msra.mxu0 %v734
      %738 = vmatpush.msra.mxu0 %v733
      %739 = vmatpush.msra.mxu0 %v732
      %740 = vmatpush.msra.mxu0 %v731
      %741 = vmatpush.msra.mxu0 %v730
      %742 = vmatpush.msra.mxu0 %v729
      %743 = vmatpush.msra.mxu0 %v728
      %744 = vmatpush.msra.mxu0 %v727
      %745 = vmatpush.msra.mxu0 %v726
      %746 = vmatpush.msra.mxu0 %v725
      %747 = vmatpush.msra.mxu0 %v724
      %748 = vmatpush.msra.mxu0 %v723
      %749 = vmatpush.msra.mxu0 %v722
      %750 = vmatpush.msra.mxu0 %v721
      %751 = vmatpush.msra.mxu0 %v720
      %752 = vmatmul.f32.gmra.mxu0 %v717
      %v753 = vpop.f32.mrf.mxu0
      %v754 = vadd.f32 0.0, %v753
      %755 = vmatmul.f32.gmra.mxu0 %v718
      %v756 = vpop.f32.mrf.mxu0
      %v757 = vadd.f32 0.0, %v756
      %758 = vdwg.mxu0
      %v759 = vadd.f32 %v712, %v754
      %v760 = vadd.f32 %v715, %v757
      %v761 = vld [vmem:[%s7] sm:$0x1]
      %v763 = vperm.slane %v761, 0
      %v765 = vadd.f32 %v759, %v763
      %v766 = vadd.f32 %v760, %v763
      %v767 = vmax.f32 %v765, 0.0
      %v768 = vmax.f32 %v766, 0.0
      %v769 = vld [vmem:[%s11] sm:$0xff]
      %vm770 = vcmask 130048
      %v772 = vsel %vm770, %v769, 0
      %774 = vmatpush.msra.mxu0 0.0
      %775 = vmatpush.msra.mxu0 0.0
      %776 = vmatpush.msra.mxu0 0.0
      %777 = vmatpush.msra.mxu0 0.0
      %778 = vmatpush.msra.mxu0 0.0
      %779 = vmatpush.msra.mxu0 0.0
      %780 = vmatpush.msra.mxu0 0.0
      %781 = vmatpush.msra.mxu0 0.0
      %782 = vmatpush.msra.mxu0 0.0
      %783 = vmatpush.msra.mxu0 0.0
      %784 = vmatpush.msra.mxu0 0.0
      %785 = vmatpush.msra.mxu0 0.0
      %786 = vmatpush.msra.mxu0 0.0
      %787 = vmatpush.msra.mxu0 0.0
      %788 = vmatpush.msra.mxu0 %v768
      %789 = vmatpush.msra.mxu0 %v767
      %790 = vmatmul.f32.gmra.mxu0 %v772
      %v791 = vpop.f32.mrf.mxu0
      %v792 = vadd.f32 0.0, %v791
      %793 = vdwg.mxu0
      %s794 = scalar_lea.vmem %s11, 8
      %v795 = vld [vmem:[%s794] sm:$0xff]
      %v797 = vsel %vm770, %v795, 0
      %799 = vmatpush.msra.mxu0 0.0
      %800 = vmatpush.msra.mxu0 0.0
      %801 = vmatpush.msra.mxu0 0.0
      %802 = vmatpush.msra.mxu0 0.0
      %803 = vmatpush.msra.mxu0 0.0
      %804 = vmatpush.msra.mxu0 0.0
      %805 = vmatpush.msra.mxu0 0.0
      %806 = vmatpush.msra.mxu0 0.0
      %807 = vmatpush.msra.mxu0 0.0
      %808 = vmatpush.msra.mxu0 0.0
      %809 = vmatpush.msra.mxu0 0.0
      %810 = vmatpush.msra.mxu0 0.0
      %811 = vmatpush.msra.mxu0 0.0
      %812 = vmatpush.msra.mxu0 0.0
      %813 = vmatpush.msra.mxu0 %v768
      %814 = vmatpush.msra.mxu0 %v767
      %815 = vmatmul.f32.gmra.mxu0 %v797
      %v816 = vpop.f32.mrf.mxu0
      %v817 = vadd.f32 0.0, %v816
      %818 = vdwg.mxu0
      %v819 = vmax.f32 %v792, %v817
      %v820 = vld [vmem:[%s13] sm:$0xff]
      %v821 = vld [vmem:[%s13 + $0x8] sm:$0xff]
      %v822 = vld [vmem:[%s13 + $0x10] sm:$0xff]
      %v823 = vld [vmem:[%s13 + $0x18] sm:$0xff]
      %v824 = vld [vmem:[%s13 + $0x20] sm:$0xff]
      %v825 = vld [vmem:[%s13 + $0x28] sm:$0xff]
      %v826 = vld [vmem:[%s13 + $0x30] sm:$0xff]
      %v827 = vld [vmem:[%s13 + $0x38] sm:$0xff]
      %v828 = vld [vmem:[%s13 + $0x40] sm:$0xff]
      %v829 = vld [vmem:[%s13 + $0x48] sm:$0xff]
      %v830 = vld [vmem:[%s13 + $0x50] sm:$0xff]
      %v831 = vld [vmem:[%s13 + $0x58] sm:$0xff]
      %v832 = vld [vmem:[%s13 + $0x60] sm:$0xff]
      %v833 = vld [vmem:[%s13 + $0x68] sm:$0xff]
      %v834 = vld [vmem:[%s13 + $0x70] sm:$0xff]
      %v835 = vld [vmem:[%s13 + $0x78] sm:$0xff]
      %836 = vmatpush.msra.mxu0 %v835
      %837 = vmatpush.msra.mxu0 %v834
      %838 = vmatpush.msra.mxu0 %v833
      %839 = vmatpush.msra.mxu0 %v832
      %840 = vmatpush.msra.mxu0 %v831
      %841 = vmatpush.msra.mxu0 %v830
      %842 = vmatpush.msra.mxu0 %v829
      %843 = vmatpush.msra.mxu0 %v828
      %844 = vmatpush.msra.mxu0 %v827
      %845 = vmatpush.msra.mxu0 %v826
      %846 = vmatpush.msra.mxu0 %v825
      %847 = vmatpush.msra.mxu0 %v824
      %848 = vmatpush.msra.mxu0 %v823
      %849 = vmatpush.msra.mxu0 %v822
      %850 = vmatpush.msra.mxu0 %v821
      %851 = vmatpush.msra.mxu0 %v820
      %852 = vmatmul.f32.gmra.mxu0 %v819
      %v853 = vpop.f32.mrf.mxu0
      %v854 = vadd.f32 0.0, %v853
      %855 = vdwg.mxu0
      %s856 = scalar_lea.vmem %s13, 128
      %v857 = vld [vmem:[%s856] sm:$0xff]
      %v858 = vld [vmem:[%s856 + $0x8] sm:$0xff]
      %v859 = vld [vmem:[%s856 + $0x10] sm:$0xff]
      %v860 = vld [vmem:[%s856 + $0x18] sm:$0xff]
      %v861 = vld [vmem:[%s856 + $0x20] sm:$0xff]
      %v862 = vld [vmem:[%s856 + $0x28] sm:$0xff]
      %v863 = vld [vmem:[%s856 + $0x30] sm:$0xff]
      %v864 = vld [vmem:[%s856 + $0x38] sm:$0xff]
      %v865 = vld [vmem:[%s856 + $0x40] sm:$0xff]
      %v866 = vld [vmem:[%s856 + $0x48] sm:$0xff]
      %v867 = vld [vmem:[%s856 + $0x50] sm:$0xff]
      %v868 = vld [vmem:[%s856 + $0x58] sm:$0xff]
      %v869 = vld [vmem:[%s856 + $0x60] sm:$0xff]
      %v870 = vld [vmem:[%s856 + $0x68] sm:$0xff]
      %v871 = vld [vmem:[%s856 + $0x70] sm:$0xff]
      %v872 = vld [vmem:[%s856 + $0x78] sm:$0xff]
      %873 = vmatpush.msra.mxu0 %v872
      %874 = vmatpush.msra.mxu0 %v871
      %875 = vmatpush.msra.mxu0 %v870
      %876 = vmatpush.msra.mxu0 %v869
      %877 = vmatpush.msra.mxu0 %v868
      %878 = vmatpush.msra.mxu0 %v867
      %879 = vmatpush.msra.mxu0 %v866
      %880 = vmatpush.msra.mxu0 %v865
      %881 = vmatpush.msra.mxu0 %v864
      %882 = vmatpush.msra.mxu0 %v863
      %883 = vmatpush.msra.mxu0 %v862
      %884 = vmatpush.msra.mxu0 %v861
      %885 = vmatpush.msra.mxu0 %v860
      %886 = vmatpush.msra.mxu0 %v859
      %887 = vmatpush.msra.mxu0 %v858
      %888 = vmatpush.msra.mxu0 %v857
      %889 = vmatmul.f32.gmra.mxu0 %v819
      %v890 = vpop.f32.mrf.mxu0
      %v891 = vadd.f32 0.0, %v890
      %892 = vdwg.mxu0
      %v893 = vmax.f32 %v854, %v891
      %894 = vst.msk [vmem:[#allocation4] sm:$0x1] %vm495, 0.0
      %895 = vst.msk [vmem:[#allocation4 + $0x9] sm:$0x1] %vm495, 0.0
      %896 = vst.msk [vmem:[#allocation4 + $0x1] sm:$0xff] %vm498, %v893
      %v897 = vld [vmem:[#allocation4] sm:$0xff]
      %v898 = vld [vmem:[%s3] sm:$0xff]
      %v899 = vld [vmem:[%s3 + $0x8] sm:$0xff]
      %v900 = vld [vmem:[%s3 + $0x10] sm:$0xff]
      %v901 = vld [vmem:[%s3 + $0x18] sm:$0xff]
      %v902 = vld [vmem:[%s3 + $0x20] sm:$0xff]
      %v903 = vld [vmem:[%s3 + $0x28] sm:$0xff]
      %v904 = vld [vmem:[%s3 + $0x30] sm:$0xff]
      %v905 = vld [vmem:[%s3 + $0x38] sm:$0xff]
      %v906 = vld [vmem:[#allocation4 + $0x1] sm:$0xff]
      %s907 = scalar_lea.vmem %s3, 64
      %v908 = vld [vmem:[%s907] sm:$0xff]
      %v909 = vld [vmem:[%s907 + $0x8] sm:$0xff]
      %v910 = vld [vmem:[%s907 + $0x10] sm:$0xff]
      %v911 = vld [vmem:[%s907 + $0x18] sm:$0xff]
      %v912 = vld [vmem:[%s907 + $0x20] sm:$0xff]
      %v913 = vld [vmem:[%s907 + $0x28] sm:$0xff]
      %v914 = vld [vmem:[%s907 + $0x30] sm:$0xff]
      %v915 = vld [vmem:[%s907 + $0x38] sm:$0xff]
      %v917 = vsel %vm498, %v906, 0
      %919 = vmatpush.msra.mxu0 0.0
      %920 = vmatpush.msra.mxu0 0.0
      %921 = vmatpush.msra.mxu0 0.0
      %922 = vmatpush.msra.mxu0 0.0
      %923 = vmatpush.msra.mxu0 0.0
      %924 = vmatpush.msra.mxu0 0.0
      %925 = vmatpush.msra.mxu0 0.0
      %926 = vmatpush.msra.mxu0 0.0
      %927 = vmatpush.msra.mxu0 %v915
      %928 = vmatpush.msra.mxu0 %v914
      %929 = vmatpush.msra.mxu0 %v913
      %930 = vmatpush.msra.mxu0 %v912
      %931 = vmatpush.msra.mxu0 %v911
      %932 = vmatpush.msra.mxu0 %v910
      %933 = vmatpush.msra.mxu0 %v909
      %934 = vmatpush.msra.mxu0 %v908
      %935 = vmatmul.f32.gmra.mxu0 %v917
      %v936 = vpop.f32.mrf.mxu0
      %v937 = vadd.f32 0.0, %v936
      %938 = vdwg.mxu0
      %v940 = vsel %vm498, %v897, 0
      %942 = vmatpush.msra.mxu0 0.0
      %943 = vmatpush.msra.mxu0 0.0
      %944 = vmatpush.msra.mxu0 0.0
      %945 = vmatpush.msra.mxu0 0.0
      %946 = vmatpush.msra.mxu0 0.0
      %947 = vmatpush.msra.mxu0 0.0
      %948 = vmatpush.msra.mxu0 0.0
      %949 = vmatpush.msra.mxu0 0.0
      %950 = vmatpush.msra.mxu0 %v905
      %951 = vmatpush.msra.mxu0 %v904
      %952 = vmatpush.msra.mxu0 %v903
      %953 = vmatpush.msra.mxu0 %v902
      %954 = vmatpush.msra.mxu0 %v901
      %955 = vmatpush.msra.mxu0 %v900
      %956 = vmatpush.msra.mxu0 %v899
      %957 = vmatpush.msra.mxu0 %v898
      %958 = vmatmul.f32.gmra.mxu0 %v940
      %v959 = vpop.f32.mrf.mxu0
      %v960 = vadd.f32 %v937, %v959
      %961 = vdwg.mxu0
      %v962 = vld [vmem:[#allocation4 + $0x2] sm:$0xff]
      %s963 = scalar_lea.vmem %s3, 128
      %v964 = vld [vmem:[%s963] sm:$0xff]
      %v965 = vld [vmem:[%s963 + $0x8] sm:$0xff]
      %v966 = vld [vmem:[%s963 + $0x10] sm:$0xff]
      %v967 = vld [vmem:[%s963 + $0x18] sm:$0xff]
      %v968 = vld [vmem:[%s963 + $0x20] sm:$0xff]
      %v969 = vld [vmem:[%s963 + $0x28] sm:$0xff]
      %v970 = vld [vmem:[%s963 + $0x30] sm:$0xff]
      %v971 = vld [vmem:[%s963 + $0x38] sm:$0xff]
      %v973 = vsel %vm498, %v962, 0
      %975 = vmatpush.msra.mxu0 0.0
      %976 = vmatpush.msra.mxu0 0.0
      %977 = vmatpush.msra.mxu0 0.0
      %978 = vmatpush.msra.mxu0 0.0
      %979 = vmatpush.msra.mxu0 0.0
      %980 = vmatpush.msra.mxu0 0.0
      %981 = vmatpush.msra.mxu0 0.0
      %982 = vmatpush.msra.mxu0 0.0
      %983 = vmatpush.msra.mxu0 %v971
      %984 = vmatpush.msra.mxu0 %v970
      %985 = vmatpush.msra.mxu0 %v969
      %986 = vmatpush.msra.mxu0 %v968
      %987 = vmatpush.msra.mxu0 %v967
      %988 = vmatpush.msra.mxu0 %v966
      %989 = vmatpush.msra.mxu0 %v965
      %990 = vmatpush.msra.mxu0 %v964
      %991 = vmatmul.f32.gmra.mxu0 %v973
      %v992 = vpop.f32.mrf.mxu0
      %v993 = vadd.f32 0.0, %v992
      %994 = vdwg.mxu0
      %v995 = vadd.f32 %v960, %v993
      %v996 = vld [vmem:[%s8] sm:$0x1]
      %v998 = vperm.slane %v996, 0
      %v1000 = vadd.f32 %v995, %v998
      %v1001 = vmax.f32 %v1000, 0.0
      %1002 = vst [vmem:[#allocation5] sm:$0x1] 0.0
      %1003 = vst [vmem:[#allocation5 + $0x9] sm:$0x1] 0.0
      %1004 = vst [vmem:[#allocation5 + $0x1] sm:$0xff] %v1001
      %v1005 = vld [vmem:[#allocation5] sm:$0xff]
      %v1006 = vld [vmem:[%s4] sm:$0xff]
      %v1007 = vld [vmem:[%s4 + $0x8] sm:$0xff]
      %v1008 = vld [vmem:[%s4 + $0x10] sm:$0xff]
      %v1009 = vld [vmem:[%s4 + $0x18] sm:$0xff]
      %v1010 = vld [vmem:[%s4 + $0x20] sm:$0xff]
      %v1011 = vld [vmem:[%s4 + $0x28] sm:$0xff]
      %v1012 = vld [vmem:[%s4 + $0x30] sm:$0xff]
      %v1013 = vld [vmem:[%s4 + $0x38] sm:$0xff]
      %v1014 = vld [vmem:[%s4 + $0x40] sm:$0xff]
      %v1015 = vld [vmem:[%s4 + $0x48] sm:$0xff]
      %v1016 = vld [vmem:[%s4 + $0x50] sm:$0xff]
      %v1017 = vld [vmem:[%s4 + $0x58] sm:$0xff]
      %v1018 = vld [vmem:[%s4 + $0x60] sm:$0xff]
      %v1019 = vld [vmem:[%s4 + $0x68] sm:$0xff]
      %v1020 = vld [vmem:[%s4 + $0x70] sm:$0xff]
      %v1021 = vld [vmem:[%s4 + $0x78] sm:$0xff]
      %v1022 = vld [vmem:[#allocation5 + $0x1] sm:$0xff]
      %s1023 = scalar_lea.vmem %s4, 128
      %v1024 = vld [vmem:[%s1023] sm:$0xff]
      %v1025 = vld [vmem:[%s1023 + $0x8] sm:$0xff]
      %v1026 = vld [vmem:[%s1023 + $0x10] sm:$0xff]
      %v1027 = vld [vmem:[%s1023 + $0x18] sm:$0xff]
      %v1028 = vld [vmem:[%s1023 + $0x20] sm:$0xff]
      %v1029 = vld [vmem:[%s1023 + $0x28] sm:$0xff]
      %v1030 = vld [vmem:[%s1023 + $0x30] sm:$0xff]
      %v1031 = vld [vmem:[%s1023 + $0x38] sm:$0xff]
      %v1032 = vld [vmem:[%s1023 + $0x40] sm:$0xff]
      %v1033 = vld [vmem:[%s1023 + $0x48] sm:$0xff]
      %v1034 = vld [vmem:[%s1023 + $0x50] sm:$0xff]
      %v1035 = vld [vmem:[%s1023 + $0x58] sm:$0xff]
      %v1036 = vld [vmem:[%s1023 + $0x60] sm:$0xff]
      %v1037 = vld [vmem:[%s1023 + $0x68] sm:$0xff]
      %v1038 = vld [vmem:[%s1023 + $0x70] sm:$0xff]
      %v1039 = vld [vmem:[%s1023 + $0x78] sm:$0xff]
      %1040 = vmatpush.msra.mxu0 %v1039
      %1041 = vmatpush.msra.mxu0 %v1038
      %1042 = vmatpush.msra.mxu0 %v1037
      %1043 = vmatpush.msra.mxu0 %v1036
      %1044 = vmatpush.msra.mxu0 %v1035
      %1045 = vmatpush.msra.mxu0 %v1034
      %1046 = vmatpush.msra.mxu0 %v1033
      %1047 = vmatpush.msra.mxu0 %v1032
      %1048 = vmatpush.msra.mxu0 %v1031
      %1049 = vmatpush.msra.mxu0 %v1030
      %1050 = vmatpush.msra.mxu0 %v1029
      %1051 = vmatpush.msra.mxu0 %v1028
      %1052 = vmatpush.msra.mxu0 %v1027
      %1053 = vmatpush.msra.mxu0 %v1026
      %1054 = vmatpush.msra.mxu0 %v1025
      %1055 = vmatpush.msra.mxu0 %v1024
      %1056 = vmatmul.f32.gmra.mxu0 %v1022
      %v1057 = vpop.f32.mrf.mxu0
      %v1058 = vadd.f32 0.0, %v1057
      %1059 = vdwg.mxu0
      %1060 = vmatpush.msra.mxu0 %v1021
      %1061 = vmatpush.msra.mxu0 %v1020
      %1062 = vmatpush.msra.mxu0 %v1019
      %1063 = vmatpush.msra.mxu0 %v1018
      %1064 = vmatpush.msra.mxu0 %v1017
      %1065 = vmatpush.msra.mxu0 %v1016
      %1066 = vmatpush.msra.mxu0 %v1015
      %1067 = vmatpush.msra.mxu0 %v1014
      %1068 = vmatpush.msra.mxu0 %v1013
      %1069 = vmatpush.msra.mxu0 %v1012
      %1070 = vmatpush.msra.mxu0 %v1011
      %1071 = vmatpush.msra.mxu0 %v1010
      %1072 = vmatpush.msra.mxu0 %v1009
      %1073 = vmatpush.msra.mxu0 %v1008
      %1074 = vmatpush.msra.mxu0 %v1007
      %1075 = vmatpush.msra.mxu0 %v1006
      %1076 = vmatmul.f32.gmra.mxu0 %v1005
      %v1077 = vpop.f32.mrf.mxu0
      %v1078 = vadd.f32 %v1058, %v1077
      %1079 = vdwg.mxu0
      %v1080 = vld [vmem:[#allocation5 + $0x2] sm:$0xff]
      %s1081 = scalar_lea.vmem %s4, 256
      %v1082 = vld [vmem:[%s1081] sm:$0xff]
      %v1083 = vld [vmem:[%s1081 + $0x8] sm:$0xff]
      %v1084 = vld [vmem:[%s1081 + $0x10] sm:$0xff]
      %v1085 = vld [vmem:[%s1081 + $0x18] sm:$0xff]
      %v1086 = vld [vmem:[%s1081 + $0x20] sm:$0xff]
      %v1087 = vld [vmem:[%s1081 + $0x28] sm:$0xff]
      %v1088 = vld [vmem:[%s1081 + $0x30] sm:$0xff]
      %v1089 = vld [vmem:[%s1081 + $0x38] sm:$0xff]
      %v1090 = vld [vmem:[%s1081 + $0x40] sm:$0xff]
      %v1091 = vld [vmem:[%s1081 + $0x48] sm:$0xff]
      %v1092 = vld [vmem:[%s1081 + $0x50] sm:$0xff]
      %v1093 = vld [vmem:[%s1081 + $0x58] sm:$0xff]
      %v1094 = vld [vmem:[%s1081 + $0x60] sm:$0xff]
      %v1095 = vld [vmem:[%s1081 + $0x68] sm:$0xff]
      %v1096 = vld [vmem:[%s1081 + $0x70] sm:$0xff]
      %v1097 = vld [vmem:[%s1081 + $0x78] sm:$0xff]
      %1098 = vmatpush.msra.mxu0 %v1097
      %1099 = vmatpush.msra.mxu0 %v1096
      %1100 = vmatpush.msra.mxu0 %v1095
      %1101 = vmatpush.msra.mxu0 %v1094
      %1102 = vmatpush.msra.mxu0 %v1093
      %1103 = vmatpush.msra.mxu0 %v1092
      %1104 = vmatpush.msra.mxu0 %v1091
      %1105 = vmatpush.msra.mxu0 %v1090
      %1106 = vmatpush.msra.mxu0 %v1089
      %1107 = vmatpush.msra.mxu0 %v1088
      %1108 = vmatpush.msra.mxu0 %v1087
      %1109 = vmatpush.msra.mxu0 %v1086
      %1110 = vmatpush.msra.mxu0 %v1085
      %1111 = vmatpush.msra.mxu0 %v1084
      %1112 = vmatpush.msra.mxu0 %v1083
      %1113 = vmatpush.msra.mxu0 %v1082
      %1114 = vmatmul.f32.gmra.mxu0 %v1080
      %v1115 = vpop.f32.mrf.mxu0
      %v1116 = vadd.f32 0.0, %v1115
      %1117 = vdwg.mxu0
      %v1118 = vadd.f32 %v1078, %v1116
      %v1119 = vld [vmem:[%s9] sm:$0x1]
      %v1121 = vperm.slane %v1119, 0
      %v1123 = vadd.f32 %v1118, %v1121
      %v1124 = vmax.f32 %v1123, 0.0
      %v1125 = vld [vmem:[%s12] sm:$0xf]
      %vm1126 = vcmask 64512
      %v1128 = vsel %vm1126, %v1125, 0
      %1130 = vmatpush.msra.mxu0 0.0
      %1131 = vmatpush.msra.mxu0 0.0
      %1132 = vmatpush.msra.mxu0 0.0
      %1133 = vmatpush.msra.mxu0 0.0
      %1134 = vmatpush.msra.mxu0 0.0
      %1135 = vmatpush.msra.mxu0 0.0
      %1136 = vmatpush.msra.mxu0 0.0
      %1137 = vmatpush.msra.mxu0 0.0
      %1138 = vmatpush.msra.mxu0 0.0
      %1139 = vmatpush.msra.mxu0 0.0
      %1140 = vmatpush.msra.mxu0 0.0
      %1141 = vmatpush.msra.mxu0 0.0
      %1142 = vmatpush.msra.mxu0 0.0
      %1143 = vmatpush.msra.mxu0 0.0
      %1144 = vmatpush.msra.mxu0 0.0
      %1145 = vmatpush.msra.mxu0 %v1124
      %1146 = vmatmul.f32.gmra.mxu0 %v1128
      %v1147 = vpop.f32.mrf.mxu0
      %v1148 = vadd.f32 0.0, %v1147
      %1149 = vdwg.mxu0
      %s1150 = scalar_lea.vmem %s12, 4
      %v1151 = vld [vmem:[%s1150] sm:$0xf]
      %v1153 = vsel %vm1126, %v1151, 0
      %1155 = vmatpush.msra.mxu0 0.0
      %1156 = vmatpush.msra.mxu0 0.0
      %1157 = vmatpush.msra.mxu0 0.0
      %1158 = vmatpush.msra.mxu0 0.0
      %1159 = vmatpush.msra.mxu0 0.0
      %1160 = vmatpush.msra.mxu0 0.0
      %1161 = vmatpush.msra.mxu0 0.0
      %1162 = vmatpush.msra.mxu0 0.0
      %1163 = vmatpush.msra.mxu0 0.0
      %1164 = vmatpush.msra.mxu0 0.0
      %1165 = vmatpush.msra.mxu0 0.0
      %1166 = vmatpush.msra.mxu0 0.0
      %1167 = vmatpush.msra.mxu0 0.0
      %1168 = vmatpush.msra.mxu0 0.0
      %1169 = vmatpush.msra.mxu0 0.0
      %1170 = vmatpush.msra.mxu0 %v1124
      %1171 = vmatmul.f32.gmra.mxu0 %v1153
      %v1172 = vpop.f32.mrf.mxu0
      %v1173 = vadd.f32 0.0, %v1172
      %1174 = vdwg.mxu0
      %v1175 = vmax.f32 %v1148, %v1173
      %v1176 = vld [vmem:[%s14] sm:$0xff]
      %v1177 = vld [vmem:[%s14 + $0x8] sm:$0xff]
      %v1178 = vld [vmem:[%s14 + $0x10] sm:$0xff]
      %v1179 = vld [vmem:[%s14 + $0x18] sm:$0xff]
      %v1180 = vld [vmem:[%s14 + $0x20] sm:$0xff]
      %v1181 = vld [vmem:[%s14 + $0x28] sm:$0xff]
      %v1182 = vld [vmem:[%s14 + $0x30] sm:$0xff]
      %v1183 = vld [vmem:[%s14 + $0x38] sm:$0xff]
      %v1184 = vld [vmem:[%s14 + $0x40] sm:$0xff]
      %v1185 = vld [vmem:[%s14 + $0x48] sm:$0xff]
      %v1186 = vld [vmem:[%s14 + $0x50] sm:$0xff]
      %v1187 = vld [vmem:[%s14 + $0x58] sm:$0xff]
      %v1188 = vld [vmem:[%s14 + $0x60] sm:$0xff]
      %v1189 = vld [vmem:[%s14 + $0x68] sm:$0xff]
      %v1190 = vld [vmem:[%s14 + $0x70] sm:$0xff]
      %v1191 = vld [vmem:[%s14 + $0x78] sm:$0xff]
      %1192 = vmatpush.msra.mxu0 %v1191
      %1193 = vmatpush.msra.mxu0 %v1190
      %1194 = vmatpush.msra.mxu0 %v1189
      %1195 = vmatpush.msra.mxu0 %v1188
      %1196 = vmatpush.msra.mxu0 %v1187
      %1197 = vmatpush.msra.mxu0 %v1186
      %1198 = vmatpush.msra.mxu0 %v1185
      %1199 = vmatpush.msra.mxu0 %v1184
      %1200 = vmatpush.msra.mxu0 %v1183
      %1201 = vmatpush.msra.mxu0 %v1182
      %1202 = vmatpush.msra.mxu0 %v1181
      %1203 = vmatpush.msra.mxu0 %v1180
      %1204 = vmatpush.msra.mxu0 %v1179
      %1205 = vmatpush.msra.mxu0 %v1178
      %1206 = vmatpush.msra.mxu0 %v1177
      %1207 = vmatpush.msra.mxu0 %v1176
      %1208 = vmatmul.f32.gmra.mxu0 %v1175
      %v1209 = vpop.f32.mrf.mxu0
      %v1210 = vadd.f32 0.0, %v1209
      %1211 = vdwg.mxu0
      %s1212 = scalar_lea.vmem %s14, 128
      %v1213 = vld [vmem:[%s1212] sm:$0xff]
      %v1214 = vld [vmem:[%s1212 + $0x8] sm:$0xff]
      %v1215 = vld [vmem:[%s1212 + $0x10] sm:$0xff]
      %v1216 = vld [vmem:[%s1212 + $0x18] sm:$0xff]
      %v1217 = vld [vmem:[%s1212 + $0x20] sm:$0xff]
      %v1218 = vld [vmem:[%s1212 + $0x28] sm:$0xff]
      %v1219 = vld [vmem:[%s1212 + $0x30] sm:$0xff]
      %v1220 = vld [vmem:[%s1212 + $0x38] sm:$0xff]
      %v1221 = vld [vmem:[%s1212 + $0x40] sm:$0xff]
      %v1222 = vld [vmem:[%s1212 + $0x48] sm:$0xff]
      %v1223 = vld [vmem:[%s1212 + $0x50] sm:$0xff]
      %v1224 = vld [vmem:[%s1212 + $0x58] sm:$0xff]
      %v1225 = vld [vmem:[%s1212 + $0x60] sm:$0xff]
      %v1226 = vld [vmem:[%s1212 + $0x68] sm:$0xff]
      %v1227 = vld [vmem:[%s1212 + $0x70] sm:$0xff]
      %v1228 = vld [vmem:[%s1212 + $0x78] sm:$0xff]
      %1229 = vmatpush.msra.mxu0 %v1228
      %1230 = vmatpush.msra.mxu0 %v1227
      %1231 = vmatpush.msra.mxu0 %v1226
      %1232 = vmatpush.msra.mxu0 %v1225
      %1233 = vmatpush.msra.mxu0 %v1224
      %1234 = vmatpush.msra.mxu0 %v1223
      %1235 = vmatpush.msra.mxu0 %v1222
      %1236 = vmatpush.msra.mxu0 %v1221
      %1237 = vmatpush.msra.mxu0 %v1220
      %1238 = vmatpush.msra.mxu0 %v1219
      %1239 = vmatpush.msra.mxu0 %v1218
      %1240 = vmatpush.msra.mxu0 %v1217
      %1241 = vmatpush.msra.mxu0 %v1216
      %1242 = vmatpush.msra.mxu0 %v1215
      %1243 = vmatpush.msra.mxu0 %v1214
      %1244 = vmatpush.msra.mxu0 %v1213
      %1245 = vmatmul.f32.gmra.mxu0 %v1175
      %v1246 = vpop.f32.mrf.mxu0
      %v1247 = vadd.f32 0.0, %v1246
      %1248 = vdwg.mxu0
      %v1249 = vmax.f32 %v1210, %v1247
      %1250 = vst.msk [vmem:[#allocation6] sm:$0x1] %vm495, 0.0
      %1251 = vst.msk [vmem:[#allocation6 + $0x5] sm:$0x1] %vm495, 0.0
      %vm1252 = vcmask 519168
      %1253 = vst.msk [vmem:[#allocation6 + $0x1] sm:$0xf] %vm1252, %v1249
      %v1254 = vld [vmem:[#allocation6] sm:$0xf]
      %v1255 = vld [vmem:[%s5] sm:$0xff]
      %v1256 = vld [vmem:[%s5 + $0x8] sm:$0xff]
      %v1257 = vld [vmem:[%s5 + $0x10] sm:$0xff]
      %v1258 = vld [vmem:[%s5 + $0x18] sm:$0xff]
      %v1259 = vld [vmem:[%s5 + $0x20] sm:$0xff]
      %v1260 = vld [vmem:[%s5 + $0x28] sm:$0xff]
      %v1261 = vld [vmem:[%s5 + $0x30] sm:$0xff]
      %v1262 = vld [vmem:[%s5 + $0x38] sm:$0xff]
      %v1263 = vld [vmem:[#allocation6 + $0x1] sm:$0xf]
      %s1264 = scalar_lea.vmem %s5, 64
      %v1265 = vld [vmem:[%s1264] sm:$0xff]
      %v1266 = vld [vmem:[%s1264 + $0x8] sm:$0xff]
      %v1267 = vld [vmem:[%s1264 + $0x10] sm:$0xff]
      %v1268 = vld [vmem:[%s1264 + $0x18] sm:$0xff]
      %v1269 = vld [vmem:[%s1264 + $0x20] sm:$0xff]
      %v1270 = vld [vmem:[%s1264 + $0x28] sm:$0xff]
      %v1271 = vld [vmem:[%s1264 + $0x30] sm:$0xff]
      %v1272 = vld [vmem:[%s1264 + $0x38] sm:$0xff]
      %v1274 = vsel %vm498, %v1263, 0
      %1276 = vmatpush.msra.mxu0 0.0
      %1277 = vmatpush.msra.mxu0 0.0
      %1278 = vmatpush.msra.mxu0 0.0
      %1279 = vmatpush.msra.mxu0 0.0
      %1280 = vmatpush.msra.mxu0 0.0
      %1281 = vmatpush.msra.mxu0 0.0
      %1282 = vmatpush.msra.mxu0 0.0
      %1283 = vmatpush.msra.mxu0 0.0
      %1284 = vmatpush.msra.mxu0 %v1272
      %1285 = vmatpush.msra.mxu0 %v1271
      %1286 = vmatpush.msra.mxu0 %v1270
      %1287 = vmatpush.msra.mxu0 %v1269
      %1288 = vmatpush.msra.mxu0 %v1268
      %1289 = vmatpush.msra.mxu0 %v1267
      %1290 = vmatpush.msra.mxu0 %v1266
      %1291 = vmatpush.msra.mxu0 %v1265
      %1292 = vmatmul.f32.gmra.mxu0 %v1274
      %v1293 = vpop.f32.mrf.mxu0
      %v1294 = vadd.f32 0.0, %v1293
      %1295 = vdwg.mxu0
      %v1297 = vsel %vm498, %v1254, 0
      %1299 = vmatpush.msra.mxu0 0.0
      %1300 = vmatpush.msra.mxu0 0.0
      %1301 = vmatpush.msra.mxu0 0.0
      %1302 = vmatpush.msra.mxu0 0.0
      %1303 = vmatpush.msra.mxu0 0.0
      %1304 = vmatpush.msra.mxu0 0.0
      %1305 = vmatpush.msra.mxu0 0.0
      %1306 = vmatpush.msra.mxu0 0.0
      %1307 = vmatpush.msra.mxu0 %v1262
      %1308 = vmatpush.msra.mxu0 %v1261
      %1309 = vmatpush.msra.mxu0 %v1260
      %1310 = vmatpush.msra.mxu0 %v1259
      %1311 = vmatpush.msra.mxu0 %v1258
      %1312 = vmatpush.msra.mxu0 %v1257
      %1313 = vmatpush.msra.mxu0 %v1256
      %1314 = vmatpush.msra.mxu0 %v1255
      %1315 = vmatmul.f32.gmra.mxu0 %v1297
      %v1316 = vpop.f32.mrf.mxu0
      %v1317 = vadd.f32 %v1294, %v1316
      %1318 = vdwg.mxu0
      %v1319 = vld [vmem:[#allocation6 + $0x2] sm:$0xf]
      %s1320 = scalar_lea.vmem %s5, 128
      %v1321 = vld [vmem:[%s1320] sm:$0xff]
      %v1322 = vld [vmem:[%s1320 + $0x8] sm:$0xff]
      %v1323 = vld [vmem:[%s1320 + $0x10] sm:$0xff]
      %v1324 = vld [vmem:[%s1320 + $0x18] sm:$0xff]
      %v1325 = vld [vmem:[%s1320 + $0x20] sm:$0xff]
      %v1326 = vld [vmem:[%s1320 + $0x28] sm:$0xff]
      %v1327 = vld [vmem:[%s1320 + $0x30] sm:$0xff]
      %v1328 = vld [vmem:[%s1320 + $0x38] sm:$0xff]
      %v1330 = vsel %vm498, %v1319, 0
      %1332 = vmatpush.msra.mxu0 0.0
      %1333 = vmatpush.msra.mxu0 0.0
      %1334 = vmatpush.msra.mxu0 0.0
      %1335 = vmatpush.msra.mxu0 0.0
      %1336 = vmatpush.msra.mxu0 0.0
      %1337 = vmatpush.msra.mxu0 0.0
      %1338 = vmatpush.msra.mxu0 0.0
      %1339 = vmatpush.msra.mxu0 0.0
      %1340 = vmatpush.msra.mxu0 %v1328
      %1341 = vmatpush.msra.mxu0 %v1327
      %1342 = vmatpush.msra.mxu0 %v1326
      %1343 = vmatpush.msra.mxu0 %v1325
      %1344 = vmatpush.msra.mxu0 %v1324
      %1345 = vmatpush.msra.mxu0 %v1323
      %1346 = vmatpush.msra.mxu0 %v1322
      %1347 = vmatpush.msra.mxu0 %v1321
      %1348 = vmatmul.f32.gmra.mxu0 %v1330
      %v1349 = vpop.f32.mrf.mxu0
      %v1350 = vadd.f32 0.0, %v1349
      %1351 = vdwg.mxu0
      %v1352 = vadd.f32 %v1317, %v1350
      %v1353 = vld [vmem:[%s10] sm:$0x1]
      %v1355 = vperm.slane %v1353, 0
      %v1357 = vadd.f32 %v1352, %v1355
      %v1358 = vmax.f32 %v1357, 0.0
      %1359 = vst [vmem:[%s492] sm:$0xf] %v1358
      %p1360 = scmp.lt.s32.totalorder %s26, 1
      %s1361 = scalar_select %p1360, %s26, 1
      %s1362 = smul.addr %s1361, 4
      %s1363 = scalar_lea.vmem %s15, %s1362
      // Predicated region
      $region81: #{_forward_jit.1} parent=79 // pred_check
        %p1364 = pneg %p364
      $region82: #{_forward_jit.1} parent=79 // pred_check_branch
        %1366 = sbr.rel (%p1364) target = $region84
      $region83: #{_forward_jit.1} parent=79 // pred_region
        _
      $region84: #{_forward_jit.1} parent=79 // pred_fallthru
        _
    $region80: #{_forward_jit.1} parent=5 // pred_fallthru
      _
    %p1367 = scmp.le.s32.totalorder 2, %s21
    // Predicated region
    $region85: #{_forward_jit.1} parent=5 // pred_check
      %p1368 = pneg %p1367
    $region86: #{_forward_jit.1} parent=5 // pred_check_branch
      %1370 = sbr.rel (%p1368) target = $region88
    $region87: #{_forward_jit.1} parent=5 // pred_region
      %s1371 = ssub.s32 %s21, 2
      // Predicated region
      $region89: #{_forward_jit.1} parent=87 // pred_check
        %p1372 = pneg %p370
      $region90: #{_forward_jit.1} parent=87 // pred_check_branch
        %1374 = sbr.rel (%p1372) target = $region92
      $region91: #{_forward_jit.1} parent=87 // pred_region
        %p1375 = scmp.lt.s32.totalorder %s27, 1
        %s1376 = scalar_select %p1375, %s27, 1
        %s1377 = smul.addr %s1376, 4
        %s1378 = scalar_lea.vmem %s15, %s1377
      $region92: #{_forward_jit.1} parent=87 // pred_fallthru
        _
    $region88: #{_forward_jit.1} parent=5 // pred_fallthru
      _
  $region6: #{_forward_jit.1} parent=0 // loop_footer
    %s25 = sadd.s32 1, %s21
  $region7: #{_forward_jit.1} parent=0 // loop_footer_branch
    %20 = sbr.rel target = $region3
  $region8: #{_forward_jit.1} parent=0 // loop_exit
    _

</llo_original>
